<compile_context>
chip_gen: v7x
topology: tpu7x:2x2x1
jax: 0.10.0
libtpu: 0.0.40
codegen_flags: <defaults>
</compile_context>

<pallas_src>
import math

import numpy as np
import jax
import jax.numpy as jnp
from jax import lax
from jax.experimental import pallas as pl
from jax.experimental.pallas import tpu as pltpu


IMAGE_SIZE = (16, 16)
NUM_CLASSES = 10
PARTICLE = {
    "conv_layers": 2,
    "conv_filters": [4, 8],
    "conv_kernels": [3, 3],
    "fc_layers": 1,
    "fc_sizes": [32],
}

LANE = 128            # FC output widths padded to this -> lane-dense final store
MAX_BATCH_TILE = 256  # per-grid-step batch tile cap (v5e/v6e); halve for v7x (64 MiB VMEM)


def _round_up(x, m):
    return (x + m - 1) // m * m


def _uniform(key, shape, bound):
    return jax.random.uniform(key, shape, jnp.float32, -bound, bound)


def _conv_band_matrix(w_torch, w_spatial):
    """Fold one conv layer's dw shift, Cin->Cout mixing and W-pool permutation
    into a (k, (W+2p)*Cin, W*Cout) band matrix (built once, on the host).

    Column order is (parity, w_out//2, cout): even-w and odd-w conv outputs
    land in the two contiguous lane halves, so the in-kernel 2x2 W-pool is just
    jnp.maximum(left_half, right_half) - no strided loads, no lane reshapes.
    """
    wc = np.asarray(w_torch, np.float32)            # (cout, cin, k, k) torch layout
    cout, cin, k, _ = wc.shape
    p = k // 2
    wpad = w_spatial + 2 * p
    wo = w_spatial // 2
    kt = np.transpose(wc, (2, 3, 1, 0))             # K[dh, dw, ci, co]
    m = np.zeros((k, wpad * cin, w_spatial * cout), np.float32)
    for j in range(wo):
        for parity in range(2):
            w_out = 2 * j + parity
            col0 = parity * (wo * cout) + j * cout
            for dw in range(k):
                r0 = (w_out + dw) * cin
                m[:, r0:r0 + cin, col0:col0 + cout] = kt[:, dw]
    return jnp.asarray(m)


# ----------------------------------------------------------------------------
# Fused forward kernel (whole network in one pallas_call, batch grid)
# ----------------------------------------------------------------------------
def _build_fused_forward(tn, n_blocks, conv_shapes, fc_shapes, out_pad):
    """conv_shapes: [(H, W, Cin, Cout, k)] (per-layer INPUT spatial dims),
    fc_shapes: [(in_dim, out_pad, relu)]."""
    n_conv = len(conv_shapes)
    n_fc = len(fc_shapes)

    # static sanity checks (review: 'same' padding / even pooling assumptions)
    for (h, w, cin, cout, k) in conv_shapes:
        assert k % 2 == 1, "only odd kernel sizes ('same' padding) supported"
        assert h % 2 == 0 and w % 2 == 0, "2x2/2 pooling needs even spatial dims"

    h_l, w_l, _, c_l, _ = conv_shapes[-1]
    ho_l, wo_l = h_l // 2, w_l // 2
    fc1_chunk = wo_l * c_l
    assert fc_shapes[0][0] == ho_l * fc1_chunk

    def kernel(*refs):
        x_ref = refs[0]
        conv_refs = refs[1:1 + 2 * n_conv]
        fc_refs = refs[1 + 2 * n_conv:1 + 2 * (n_conv + n_fc)]
        out_ref = refs[1 + 2 * (n_conv + n_fc)]
        xp_refs = refs[2 + 2 * (n_conv + n_fc):]

        act = x_ref[...]                               # (tn, H, W*Cin) f32
        pooled = None
        for li, (h, w, cin, cout, k) in enumerate(conv_shapes):
            m_ref = conv_refs[2 * li]                  # (k, (W+2p)*Cin, W*Cout)
            b_ref = conv_refs[2 * li + 1]              # (1, W*Cout)
            xp_ref = xp_refs[li]                       # (tn, H+2p, (W+2p)*Cin)
            p = k // 2
            wpad = w + 2 * p
            ho, wo = h // 2, w // 2
            half = wo * cout

            # Padded input: write the interior once, zero ONLY the halo strips.
            xp_ref[:, p:p + h, p * cin:(p + w) * cin] = act
            if p > 0:
                zrow = jnp.zeros((tn, p, wpad * cin), jnp.float32)
                zcol = jnp.zeros((tn, h, p * cin), jnp.float32)
                xp_ref[:, 0:p, :] = zrow
                xp_ref[:, p + h:, :] = zrow
                xp_ref[:, p:p + h, 0:p * cin] = zcol
                xp_ref[:, p:p + h, (p + w) * cin:] = zcol

            # Conv as k banded matmuls: each dh tap is a full-lane-width,
            # sublane-shifted read; dw shift + channel mixing + pool column
            # permutation live in the precomputed band matrix.
            rows = xp_ref[:, 0:h, :].reshape(tn * h, wpad * cin)
            y = jnp.dot(rows, m_ref[0], preferred_element_type=jnp.float32)
            for dh in range(1, k):
                rows = xp_ref[:, dh:dh + h, :].reshape(tn * h, wpad * cin)
                y = y + jnp.dot(rows, m_ref[dh],
                                preferred_element_type=jnp.float32)
            y = jnp.maximum(y + b_ref[...], 0.0)       # (tn*H, W*Cout)

            # 2x2/2 max-pool, entirely in registers.
            y3 = y.reshape(tn * ho, 2, w * cout)       # leading-dim split only
            hp = jnp.maximum(y3[:, 0], y3[:, 1])       # H-pool  (tn*Ho, W*Cout)
            pooled = jnp.maximum(hp[:, :half], hp[:, half:])   # W-pool (tn*Ho, Wo*Cout)

            if li + 1 < n_conv:
                act = pooled.reshape(tn, ho, wo * cout)

        # FC1 without a sublane->lane flatten: accumulate over spatial-height
        # chunks of the (h, w, c)-permuted FC1 weight (rows already match the
        # pooled lane order (w, c)).
        p3 = pooled.reshape(tn, ho_l, fc1_chunk)
        w1_ref, b1_ref = fc_refs[0], fc_refs[1]
        hcur = jnp.dot(p3[:, 0, :], w1_ref[0:fc1_chunk, :],
                       preferred_element_type=jnp.float32)
        for hh in range(1, ho_l):
            hcur = hcur + jnp.dot(
                p3[:, hh, :], w1_ref[hh * fc1_chunk:(hh + 1) * fc1_chunk, :],
                preferred_element_type=jnp.float32)
        hcur = hcur + b1_ref[...]
        if fc_shapes[0][2]:
            hcur = jnp.maximum(hcur, 0.0)

        # Remaining FC layers (M == tn rows: grows with the batch tile).
        for fi in range(1, n_fc):
            wfc_ref, bfc_ref = fc_refs[2 * fi], fc_refs[2 * fi + 1]
            hcur = jnp.dot(hcur, wfc_ref[...],
                           preferred_element_type=jnp.float32) + bfc_ref[...]
            if fc_shapes[fi][2]:
                hcur = jnp.maximum(hcur, 0.0)

        out_ref[...] = hcur.astype(out_ref.dtype)      # (tn, 128) lane-dense

    # ---------------- specs ----------------
    h0, w0, cin0, _, _ = conv_shapes[0]
    in_specs = [pl.BlockSpec((tn, h0, w0 * cin0), lambda b: (b, 0, 0))]
    scratch_shapes = []
    for (h, w, cin, cout, k) in conv_shapes:
        p = k // 2
        wpad = w + 2 * p
        in_specs.append(pl.BlockSpec((k, wpad * cin, w * cout),
                                     lambda b: (0, 0, 0)))
        in_specs.append(pl.BlockSpec((1, w * cout), lambda b: (0, 0)))
        scratch_shapes.append(
            pltpu.VMEM((tn, h + 2 * p, wpad * cin), jnp.float32))
    for (in_dim, o_pad, _) in fc_shapes:
        in_specs.append(pl.BlockSpec((in_dim, o_pad), lambda b: (0, 0)))
        in_specs.append(pl.BlockSpec((1, o_pad), lambda b: (0, 0)))
    out_specs = pl.BlockSpec((tn, out_pad), lambda b: (b, 0))

    return pl.pallas_call(
        kernel,
        out_shape=jax.ShapeDtypeStruct((n_blocks * tn, out_pad), jnp.float32),
        grid_spec=pltpu.PrefetchScalarGridSpec(
            num_scalar_prefetch=0,
            grid=(n_blocks,),
            in_specs=in_specs,
            out_specs=out_specs,
            scratch_shapes=scratch_shapes),
        compiler_params=pltpu.CompilerParams(
            dimension_semantics=("parallel",),
            vmem_limit_bytes=32 * 1024 * 1024),
    )


# ----------------------------------------------------------------------------
# Deterministic parameter construction (torch-style init) + kernel-ready forms
# ----------------------------------------------------------------------------
def init_params(particle, num_classes, image_size, key):
    params = {"conv": [], "fc": []}
    in_ch = 1
    h, w = image_size
    conv_shapes = []
    for i in range(particle["conv_layers"]):
        out_ch = particle["conv_filters"][i]
        k = particle["conv_kernels"][i]
        key, kw_, kb_ = jax.random.split(key, 3)
        bound = 1.0 / math.sqrt(in_ch * k * k)
        w_conv = _uniform(kw_, (out_ch, in_ch, k, k), bound)   # torch layout
        b_conv = _uniform(kb_, (out_ch,), bound)
        params["conv"].append({
            "w_torch": w_conv, "b": b_conv,
            "wm": _conv_band_matrix(w_conv, w),                # f32 band matrix
            "bm": jnp.tile(b_conv, w).reshape(1, w * out_ch).astype(jnp.float32),
        })
        conv_shapes.append((h, w, in_ch, out_ch, k))
        in_ch = out_ch
        h, w = h // 2, w // 2

    conv_out_c, conv_out_h, conv_out_w = in_ch, h, w
    flat_f = conv_out_c * conv_out_h * conv_out_w

    fc_sizes = list(particle["fc_sizes"][: particle["fc_layers"]]) + [num_classes]
    in_f = flat_f
    in_pad = flat_f
    fc_shapes = []
    for li, out_f in enumerate(fc_sizes):
        key, kw_, kb_ = jax.random.split(key, 3)
        bound = 1.0 / math.sqrt(in_f)
        w_fc = _uniform(kw_, (out_f, in_f), bound)             # torch layout
        b_fc = _uniform(kb_, (out_f,), bound)
        wm = w_fc.T                                            # (in_f, out_f)
        if li == 0:
            # reorder rows from torch's (c, h, w) flatten order to the kernel's
            # (h, w, c) order: done once here -> no runtime transpose.
            wm = wm.reshape(conv_out_c, conv_out_h * conv_out_w, out_f)
            wm = jnp.transpose(wm, (1, 0, 2)).reshape(in_f, out_f)
        out_p = _round_up(out_f, LANE)
        wm_pad = jnp.zeros((in_pad, out_p), jnp.float32).at[:in_f, :out_f].set(wm)
        bm_pad = jnp.zeros((1, out_p), jnp.float32).at[0, :out_f].set(b_fc)
        params["fc"].append({
            "w_torch": w_fc, "b": b_fc,
            "wm": wm_pad,     # f32 (tiny matmuls; keeps numerics tight)
            "bm": bm_pad,
        })
        fc_shapes.append((in_pad, out_p, li < len(fc_sizes) - 1))
        in_f = out_f
        in_pad = out_p

    params["meta"] = {
        "conv_shapes": conv_shapes,
        "fc_shapes": fc_shapes,
        "num_classes": num_classes,
        "image_size": image_size,
    }
    return params


def pso_cnn_forward(x_nchw, params, batch_tile=None):
    """Fused Pallas forward. x_nchw: (N, 1, H, W) f32 -> (N, num_classes)."""
    meta = params["meta"]
    n = x_nchw.shape[0]
    h0, w0 = meta["image_size"]
    # NCHW with C == 1 -> (N, H, W*C) is a free reshape.
    x = x_nchw.reshape(n, h0, w0)

    tn = batch_tile if batch_tile is not None else min(n, MAX_BATCH_TILE)
    tn = min(tn, MAX_BATCH_TILE)
    if tn < n:
        tn = _round_up(tn, 8)     # blocked batch dim of the 2-D output spec
    n_pad = _round_up(n, tn)
    if n_pad != n:
        x = jnp.pad(x, ((0, n_pad - n), (0, 0), (0, 0)))

    fused = _build_fused_forward(
        tn, n_pad // tn, meta["conv_shapes"], meta["fc_shapes"],
        meta["fc_shapes"][-1][1])
    args = [x]
    for layer in params["conv"]:
        args += [layer["wm"], layer["bm"]]
    for layer in params["fc"]:
        args += [layer["wm"], layer["bm"]]
    out = fused(*args)
    return out[:n, :meta["num_classes"]]


# ----------------------------------------------------------------------------
# Pure-JAX reference (mirrors the PyTorch forward exactly, f32)
# ----------------------------------------------------------------------------
def reference_forward(x_nchw, params):
    x = jnp.transpose(x_nchw, (0, 2, 3, 1))  # NHWC
    for layer in params["conv"]:
        w_hwio = jnp.transpose(layer["w_torch"], (2, 3, 1, 0))
        x = lax.conv_general_dilated(
            x, w_hwio, window_strides=(1, 1), padding="SAME",
            dimension_numbers=("NHWC", "HWIO", "NHWC"),
            precision=lax.Precision.HIGHEST,
        ) + layer["b"]
        x = jnp.maximum(x, 0.0)
        x = lax.reduce_window(
            x, -jnp.inf, lax.max,
            window_dimensions=(1, 2, 2, 1), window_strides=(1, 2, 2, 1),
            padding="VALID",
        )
    n = x.shape[0]
    x = jnp.transpose(x, (0, 3, 1, 2)).reshape(n, -1)   # torch NCHW flatten
    n_fc = len(params["fc"])
    for i, layer in enumerate(params["fc"]):
        x = jnp.dot(x, layer["w_torch"].T,
                    precision=lax.Precision.HIGHEST) + layer["b"]
        if i < n_fc - 1:
            x = jnp.maximum(x, 0.0)
    return x


if __name__ == "__main__":
    key = jax.random.PRNGKey(0)
    key_x, key_x2, key_p = jax.random.split(key, 3)

    params = init_params(PARTICLE, NUM_CLASSES, IMAGE_SIZE, key_p)

    # batch 2 (single grid step)
    x = jax.random.normal(key_x, (2, 1, *IMAGE_SIZE), dtype=jnp.float32)
    fwd = jax.jit(lambda xx: pso_cnn_forward(xx, params))
    out = jax.block_until_ready(fwd(x))
    ref = jax.block_until_ready(reference_forward(x, params))
    assert out.shape == (2, NUM_CLASSES), out.shape
    assert jnp.allclose(out, ref, rtol=2e-2, atol=2e-2), (
        "mismatch vs reference:\n%s\n%s" % (out, ref))

    # batch 16 with batch_tile=8 -> exercises the parallel batch grid (2 steps)
    x2 = jax.random.normal(key_x2, (16, 1, *IMAGE_SIZE), dtype=jnp.float32)
    fwd2 = jax.jit(lambda xx: pso_cnn_forward(xx, params, batch_tile=8))
    out2 = jax.block_until_ready(fwd2(x2))
    ref2 = jax.block_until_ready(reference_forward(x2, params))
    assert out2.shape == (16, NUM_CLASSES), out2.shape
    assert jnp.allclose(out2, ref2, rtol=2e-2, atol=2e-2), (
        "grid-path mismatch vs reference:\n%s\n%s" % (out2, ref2))

    print("KERNEL_OK")
</pallas_src>

<mosaic_0001>
module attributes {stable_mosaic.version = 11 : i64} {
  func.func @kernel(%arg0: i32, %arg1: memref<2x16x16xf32, #tpu.memory_space<vmem>>, %arg2: memref<3x18x64xf32, #tpu.memory_space<vmem>>, %arg3: memref<1x64xf32, #tpu.memory_space<vmem>>, %arg4: memref<3x40x64xf32, #tpu.memory_space<vmem>>, %arg5: memref<1x64xf32, #tpu.memory_space<vmem>>, %arg6: memref<128x128xf32, #tpu.memory_space<vmem>>, %arg7: memref<1x128xf32, #tpu.memory_space<vmem>>, %arg8: memref<128x128xf32, #tpu.memory_space<vmem>>, %arg9: memref<1x128xf32, #tpu.memory_space<vmem>>, %arg10: memref<2x128xf32, #tpu.memory_space<vmem>>, %arg11: memref<2x18x18xf32, #tpu.memory_space<vmem>>, %arg12: memref<2x10x40xf32, #tpu.memory_space<vmem>>) attributes {dimension_semantics = [#tpu.dimension_semantics<parallel>], iteration_bounds = array<i64: 1>, scalar_prefetch = 0 : i64, scratch_operands = 2 : i64, tpu.core_type = #tpu.core_type<tc>, window_params = [{transform_indices = @transform_0, window_bounds = array<i64: 2, 16, 16>}, {pipeline_mode = #tpu.pipeline_mode<synchronous>, transform_indices = @transform_1, window_bounds = array<i64: 3, 18, 64>}, {pipeline_mode = #tpu.pipeline_mode<synchronous>, transform_indices = @transform_2, window_bounds = array<i64: 1, 64>}, {pipeline_mode = #tpu.pipeline_mode<synchronous>, transform_indices = @transform_3, window_bounds = array<i64: 3, 40, 64>}, {pipeline_mode = #tpu.pipeline_mode<synchronous>, transform_indices = @transform_4, window_bounds = array<i64: 1, 64>}, {pipeline_mode = #tpu.pipeline_mode<synchronous>, transform_indices = @transform_5, window_bounds = array<i64: 128, 128>}, {pipeline_mode = #tpu.pipeline_mode<synchronous>, transform_indices = @transform_6, window_bounds = array<i64: 1, 128>}, {pipeline_mode = #tpu.pipeline_mode<synchronous>, transform_indices = @transform_7, window_bounds = array<i64: 128, 128>}, {pipeline_mode = #tpu.pipeline_mode<synchronous>, transform_indices = @transform_8, window_bounds = array<i64: 1, 128>}, {transform_indices = @transform_9, window_bounds = array<i64: 2, 128>}]} {
    %c0 = arith.constant 0 : index
    %c0_0 = arith.constant 0 : index
    %c0_1 = arith.constant 0 : index
    %0 = vector.load %arg1[%c0, %c0_0, %c0_1] : memref<2x16x16xf32, #tpu.memory_space<vmem>>, vector<2x16x16xf32>
    %c0_2 = arith.constant 0 : index
    %c1 = arith.constant 1 : index
    %c1_3 = arith.constant 1 : index
    %1 = vector.load %arg11[%c0_2, %c1, %c1_3] : memref<2x18x18xf32, #tpu.memory_space<vmem>>, vector<2x16x16xf32>
    tpu.vector_store %arg11[%c0_2, %c1, %c1_3], %0 {strides = array<i32>} : memref<2x18x18xf32, #tpu.memory_space<vmem>>, vector<2x16x16xf32>,
    %cst = arith.constant 0.000000e+00 : f32
    %2 = vector.broadcast %cst : f32 to vector<2x1x18xf32>
    %cst_4 = arith.constant 0.000000e+00 : f32
    %3 = vector.broadcast %cst_4 : f32 to vector<2x16x1xf32>
    %c0_5 = arith.constant 0 : index
    %c0_6 = arith.constant 0 : index
    %c0_7 = arith.constant 0 : index
    %4 = vector.load %arg11[%c0_5, %c0_6, %c0_7] : memref<2x18x18xf32, #tpu.memory_space<vmem>>, vector<2x1x18xf32>
    tpu.vector_store %arg11[%c0_5, %c0_6, %c0_7], %2 {strides = array<i32>} : memref<2x18x18xf32, #tpu.memory_space<vmem>>, vector<2x1x18xf32>,
    %c0_8 = arith.constant 0 : index
    %c17 = arith.constant 17 : index
    %c0_9 = arith.constant 0 : index
    %5 = vector.load %arg11[%c0_8, %c17, %c0_9] : memref<2x18x18xf32, #tpu.memory_space<vmem>>, vector<2x1x18xf32>
    tpu.vector_store %arg11[%c0_8, %c17, %c0_9], %2 {strides = array<i32>} : memref<2x18x18xf32, #tpu.memory_space<vmem>>, vector<2x1x18xf32>,
    %c0_10 = arith.constant 0 : index
    %c1_11 = arith.constant 1 : index
    %c0_12 = arith.constant 0 : index
    %6 = vector.load %arg11[%c0_10, %c1_11, %c0_12] : memref<2x18x18xf32, #tpu.memory_space<vmem>>, vector<2x16x1xf32>
    tpu.vector_store %arg11[%c0_10, %c1_11, %c0_12], %3 {strides = array<i32>} : memref<2x18x18xf32, #tpu.memory_space<vmem>>, vector<2x16x1xf32>,
    %c0_13 = arith.constant 0 : index
    %c1_14 = arith.constant 1 : index
    %c17_15 = arith.constant 17 : index
    %7 = vector.load %arg11[%c0_13, %c1_14, %c17_15] : memref<2x18x18xf32, #tpu.memory_space<vmem>>, vector<2x16x1xf32>
    tpu.vector_store %arg11[%c0_13, %c1_14, %c17_15], %3 {strides = array<i32>} : memref<2x18x18xf32, #tpu.memory_space<vmem>>, vector<2x16x1xf32>,
    %c0_16 = arith.constant 0 : index
    %c0_17 = arith.constant 0 : index
    %c0_18 = arith.constant 0 : index
    %8 = vector.load %arg11[%c0_16, %c0_17, %c0_18] : memref<2x18x18xf32, #tpu.memory_space<vmem>>, vector<2x16x18xf32>
    %9 = vector.shape_cast %8 : vector<2x16x18xf32> to vector<32x18xf32>
    %c0_19 = arith.constant 0 : index
    %c0_20 = arith.constant 0 : index
    %c0_21 = arith.constant 0 : index
    %10 = vector.load %arg2[%c0_19, %c0_20, %c0_21] : memref<3x18x64xf32, #tpu.memory_space<vmem>>, vector<1x18x64xf32>
    %11 = vector.shape_cast %10 : vector<1x18x64xf32> to vector<18x64xf32>
    %cst_22 = arith.constant dense<0.000000e+00> : vector<32x64xf32>
    %12 = tpu.matmul %9, %11, %cst_22 {dimension_numbers = #tpu.dot_dimension_numbers<[1], [0], [0], [1], [0, 0, 1, 1], [], []>} : vector<32x18xf32>, vector<18x64xf32>, vector<32x64xf32> -> vector<32x64xf32>
    %c0_23 = arith.constant 0 : index
    %c1_24 = arith.constant 1 : index
    %c0_25 = arith.constant 0 : index
    %13 = vector.load %arg11[%c0_23, %c1_24, %c0_25] : memref<2x18x18xf32, #tpu.memory_space<vmem>>, vector<2x16x18xf32>
    %14 = vector.shape_cast %13 : vector<2x16x18xf32> to vector<32x18xf32>
    %c1_26 = arith.constant 1 : index
    %c0_27 = arith.constant 0 : index
    %c0_28 = arith.constant 0 : index
    %15 = vector.load %arg2[%c1_26, %c0_27, %c0_28] : memref<3x18x64xf32, #tpu.memory_space<vmem>>, vector<1x18x64xf32>
    %16 = vector.shape_cast %15 : vector<1x18x64xf32> to vector<18x64xf32>
    %cst_29 = arith.constant dense<0.000000e+00> : vector<32x64xf32>
    %17 = tpu.matmul %14, %16, %cst_29 {dimension_numbers = #tpu.dot_dimension_numbers<[1], [0], [0], [1], [0, 0, 1, 1], [], []>} : vector<32x18xf32>, vector<18x64xf32>, vector<32x64xf32> -> vector<32x64xf32>
    %18 = arith.addf %12, %17 : vector<32x64xf32>
    %c0_30 = arith.constant 0 : index
    %c2 = arith.constant 2 : index
    %c0_31 = arith.constant 0 : index
    %19 = vector.load %arg11[%c0_30, %c2, %c0_31] : memref<2x18x18xf32, #tpu.memory_space<vmem>>, vector<2x16x18xf32>
    %20 = vector.shape_cast %19 : vector<2x16x18xf32> to vector<32x18xf32>
    %c2_32 = arith.constant 2 : index
    %c0_33 = arith.constant 0 : index
    %c0_34 = arith.constant 0 : index
    %21 = vector.load %arg2[%c2_32, %c0_33, %c0_34] : memref<3x18x64xf32, #tpu.memory_space<vmem>>, vector<1x18x64xf32>
    %22 = vector.shape_cast %21 : vector<1x18x64xf32> to vector<18x64xf32>
    %cst_35 = arith.constant dense<0.000000e+00> : vector<32x64xf32>
    %23 = tpu.matmul %20, %22, %cst_35 {dimension_numbers = #tpu.dot_dimension_numbers<[1], [0], [0], [1], [0, 0, 1, 1], [], []>} : vector<32x18xf32>, vector<18x64xf32>, vector<32x64xf32> -> vector<32x64xf32>
    %24 = arith.addf %18, %23 : vector<32x64xf32>
    %c0_36 = arith.constant 0 : index
    %c0_37 = arith.constant 0 : index
    %25 = vector.load %arg3[%c0_36, %c0_37] : memref<1x64xf32, #tpu.memory_space<vmem>>, vector<1x64xf32>
    %26 = vector.broadcast %25 : vector<1x64xf32> to vector<32x64xf32>
    %27 = arith.addf %24, %26 : vector<32x64xf32>
    %cst_38 = arith.constant 0.000000e+00 : f32
    %28 = vector.broadcast %cst_38 : f32 to vector<32x64xf32>
    %29 = arith.maximumf %27, %28 : vector<32x64xf32>
    %30 = vector.shape_cast %29 : vector<32x64xf32> to vector<16x2x64xf32>
    %31 = vector.extract_strided_slice %30 {offsets = [0, 0, 0], sizes = [16, 1, 64], strides = [1, 1, 1]} : vector<16x2x64xf32> to vector<16x1x64xf32>
    %32 = vector.shape_cast %31 : vector<16x1x64xf32> to vector<16x64xf32>
    %33 = vector.extract_strided_slice %30 {offsets = [0, 1, 0], sizes = [16, 1, 64], strides = [1, 1, 1]} : vector<16x2x64xf32> to vector<16x1x64xf32>
    %34 = vector.shape_cast %33 : vector<16x1x64xf32> to vector<16x64xf32>
    %35 = arith.maximumf %32, %34 : vector<16x64xf32>
    %36 = vector.extract_strided_slice %35 {offsets = [0, 0], sizes = [16, 32], strides = [1, 1]} : vector<16x64xf32> to vector<16x32xf32>
    %37 = vector.extract_strided_slice %35 {offsets = [0, 32], sizes = [16, 32], strides = [1, 1]} : vector<16x64xf32> to vector<16x32xf32>
    %38 = arith.maximumf %36, %37 : vector<16x32xf32>
    %39 = vector.shape_cast %38 : vector<16x32xf32> to vector<2x8x32xf32>
    %c0_39 = arith.constant 0 : index
    %c1_40 = arith.constant 1 : index
    %c4 = arith.constant 4 : index
    %40 = vector.load %arg12[%c0_39, %c1_40, %c4] : memref<2x10x40xf32, #tpu.memory_space<vmem>>, vector<2x8x32xf32>
    tpu.vector_store %arg12[%c0_39, %c1_40, %c4], %39 {strides = array<i32>} : memref<2x10x40xf32, #tpu.memory_space<vmem>>, vector<2x8x32xf32>,
    %cst_41 = arith.constant 0.000000e+00 : f32
    %41 = vector.broadcast %cst_41 : f32 to vector<2x1x40xf32>
    %cst_42 = arith.constant 0.000000e+00 : f32
    %42 = vector.broadcast %cst_42 : f32 to vector<2x8x4xf32>
    %c0_43 = arith.constant 0 : index
    %c0_44 = arith.constant 0 : index
    %c0_45 = arith.constant 0 : index
    %43 = vector.load %arg12[%c0_43, %c0_44, %c0_45] : memref<2x10x40xf32, #tpu.memory_space<vmem>>, vector<2x1x40xf32>
    tpu.vector_store %arg12[%c0_43, %c0_44, %c0_45], %41 {strides = array<i32>} : memref<2x10x40xf32, #tpu.memory_space<vmem>>, vector<2x1x40xf32>,
    %c0_46 = arith.constant 0 : index
    %c9 = arith.constant 9 : index
    %c0_47 = arith.constant 0 : index
    %44 = vector.load %arg12[%c0_46, %c9, %c0_47] : memref<2x10x40xf32, #tpu.memory_space<vmem>>, vector<2x1x40xf32>
    tpu.vector_store %arg12[%c0_46, %c9, %c0_47], %41 {strides = array<i32>} : memref<2x10x40xf32, #tpu.memory_space<vmem>>, vector<2x1x40xf32>,
    %c0_48 = arith.constant 0 : index
    %c1_49 = arith.constant 1 : index
    %c0_50 = arith.constant 0 : index
    %45 = vector.load %arg12[%c0_48, %c1_49, %c0_50] : memref<2x10x40xf32, #tpu.memory_space<vmem>>, vector<2x8x4xf32>
    tpu.vector_store %arg12[%c0_48, %c1_49, %c0_50], %42 {strides = array<i32>} : memref<2x10x40xf32, #tpu.memory_space<vmem>>, vector<2x8x4xf32>,
    %c0_51 = arith.constant 0 : index
    %c1_52 = arith.constant 1 : index
    %c36 = arith.constant 36 : index
    %46 = vector.load %arg12[%c0_51, %c1_52, %c36] : memref<2x10x40xf32, #tpu.memory_space<vmem>>, vector<2x8x4xf32>
    tpu.vector_store %arg12[%c0_51, %c1_52, %c36], %42 {strides = array<i32>} : memref<2x10x40xf32, #tpu.memory_space<vmem>>, vector<2x8x4xf32>,
    %c0_53 = arith.constant 0 : index
    %c0_54 = arith.constant 0 : index
    %c0_55 = arith.constant 0 : index
    %47 = vector.load %arg12[%c0_53, %c0_54, %c0_55] : memref<2x10x40xf32, #tpu.memory_space<vmem>>, vector<2x8x40xf32>
    %48 = vector.shape_cast %47 : vector<2x8x40xf32> to vector<16x40xf32>
    %c0_56 = arith.constant 0 : index
    %c0_57 = arith.constant 0 : index
    %c0_58 = arith.constant 0 : index
    %49 = vector.load %arg4[%c0_56, %c0_57, %c0_58] : memref<3x40x64xf32, #tpu.memory_space<vmem>>, vector<1x40x64xf32>
    %50 = vector.shape_cast %49 : vector<1x40x64xf32> to vector<40x64xf32>
    %cst_59 = arith.constant dense<0.000000e+00> : vector<16x64xf32>
    %51 = tpu.matmul %48, %50, %cst_59 {dimension_numbers = #tpu.dot_dimension_numbers<[1], [0], [0], [1], [0, 0, 1, 1], [], []>} : vector<16x40xf32>, vector<40x64xf32>, vector<16x64xf32> -> vector<16x64xf32>
    %c0_60 = arith.constant 0 : index
    %c1_61 = arith.constant 1 : index
    %c0_62 = arith.constant 0 : index
    %52 = vector.load %arg12[%c0_60, %c1_61, %c0_62] : memref<2x10x40xf32, #tpu.memory_space<vmem>>, vector<2x8x40xf32>
    %53 = vector.shape_cast %52 : vector<2x8x40xf32> to vector<16x40xf32>
    %c1_63 = arith.constant 1 : index
    %c0_64 = arith.constant 0 : index
    %c0_65 = arith.constant 0 : index
    %54 = vector.load %arg4[%c1_63, %c0_64, %c0_65] : memref<3x40x64xf32, #tpu.memory_space<vmem>>, vector<1x40x64xf32>
    %55 = vector.shape_cast %54 : vector<1x40x64xf32> to vector<40x64xf32>
    %cst_66 = arith.constant dense<0.000000e+00> : vector<16x64xf32>
    %56 = tpu.matmul %53, %55, %cst_66 {dimension_numbers = #tpu.dot_dimension_numbers<[1], [0], [0], [1], [0, 0, 1, 1], [], []>} : vector<16x40xf32>, vector<40x64xf32>, vector<16x64xf32> -> vector<16x64xf32>
    %57 = arith.addf %51, %56 : vector<16x64xf32>
    %c0_67 = arith.constant 0 : index
    %c2_68 = arith.constant 2 : index
    %c0_69 = arith.constant 0 : index
    %58 = vector.load %arg12[%c0_67, %c2_68, %c0_69] : memref<2x10x40xf32, #tpu.memory_space<vmem>>, vector<2x8x40xf32>
    %59 = vector.shape_cast %58 : vector<2x8x40xf32> to vector<16x40xf32>
    %c2_70 = arith.constant 2 : index
    %c0_71 = arith.constant 0 : index
    %c0_72 = arith.constant 0 : index
    %60 = vector.load %arg4[%c2_70, %c0_71, %c0_72] : memref<3x40x64xf32, #tpu.memory_space<vmem>>, vector<1x40x64xf32>
    %61 = vector.shape_cast %60 : vector<1x40x64xf32> to vector<40x64xf32>
    %cst_73 = arith.constant dense<0.000000e+00> : vector<16x64xf32>
    %62 = tpu.matmul %59, %61, %cst_73 {dimension_numbers = #tpu.dot_dimension_numbers<[1], [0], [0], [1], [0, 0, 1, 1], [], []>} : vector<16x40xf32>, vector<40x64xf32>, vector<16x64xf32> -> vector<16x64xf32>
    %63 = arith.addf %57, %62 : vector<16x64xf32>
    %c0_74 = arith.constant 0 : index
    %c0_75 = arith.constant 0 : index
    %64 = vector.load %arg5[%c0_74, %c0_75] : memref<1x64xf32, #tpu.memory_space<vmem>>, vector<1x64xf32>
    %65 = vector.broadcast %64 : vector<1x64xf32> to vector<16x64xf32>
    %66 = arith.addf %63, %65 : vector<16x64xf32>
    %cst_76 = arith.constant 0.000000e+00 : f32
    %67 = vector.broadcast %cst_76 : f32 to vector<16x64xf32>
    %68 = arith.maximumf %66, %67 : vector<16x64xf32>
    %69 = vector.shape_cast %68 : vector<16x64xf32> to vector<8x2x64xf32>
    %70 = vector.extract_strided_slice %69 {offsets = [0, 0, 0], sizes = [8, 1, 64], strides = [1, 1, 1]} : vector<8x2x64xf32> to vector<8x1x64xf32>
    %71 = vector.shape_cast %70 : vector<8x1x64xf32> to vector<8x64xf32>
    %72 = vector.extract_strided_slice %69 {offsets = [0, 1, 0], sizes = [8, 1, 64], strides = [1, 1, 1]} : vector<8x2x64xf32> to vector<8x1x64xf32>
    %73 = vector.shape_cast %72 : vector<8x1x64xf32> to vector<8x64xf32>
    %74 = arith.maximumf %71, %73 : vector<8x64xf32>
    %75 = vector.extract_strided_slice %74 {offsets = [0, 0], sizes = [8, 32], strides = [1, 1]} : vector<8x64xf32> to vector<8x32xf32>
    %76 = vector.extract_strided_slice %74 {offsets = [0, 32], sizes = [8, 32], strides = [1, 1]} : vector<8x64xf32> to vector<8x32xf32>
    %77 = arith.maximumf %75, %76 : vector<8x32xf32>
    %78 = vector.shape_cast %77 : vector<8x32xf32> to vector<2x4x32xf32>
    %79 = vector.extract_strided_slice %78 {offsets = [0, 0, 0], sizes = [2, 1, 32], strides = [1, 1, 1]} : vector<2x4x32xf32> to vector<2x1x32xf32>
    %80 = vector.shape_cast %79 : vector<2x1x32xf32> to vector<2x32xf32>
    %c0_77 = arith.constant 0 : index
    %c0_78 = arith.constant 0 : index
    %81 = vector.load %arg6[%c0_77, %c0_78] : memref<128x128xf32, #tpu.memory_space<vmem>>, vector<32x128xf32>
    %cst_79 = arith.constant dense<0.000000e+00> : vector<2x128xf32>
    %82 = tpu.matmul %80, %81, %cst_79 {dimension_numbers = #tpu.dot_dimension_numbers<[1], [0], [0], [1], [0, 0, 1, 1], [], []>} : vector<2x32xf32>, vector<32x128xf32>, vector<2x128xf32> -> vector<2x128xf32>
    %83 = vector.extract_strided_slice %78 {offsets = [0, 1, 0], sizes = [2, 1, 32], strides = [1, 1, 1]} : vector<2x4x32xf32> to vector<2x1x32xf32>
    %84 = vector.shape_cast %83 : vector<2x1x32xf32> to vector<2x32xf32>
    %c32 = arith.constant 32 : index
    %c0_80 = arith.constant 0 : index
    %85 = vector.load %arg6[%c32, %c0_80] : memref<128x128xf32, #tpu.memory_space<vmem>>, vector<32x128xf32>
    %cst_81 = arith.constant dense<0.000000e+00> : vector<2x128xf32>
    %86 = tpu.matmul %84, %85, %cst_81 {dimension_numbers = #tpu.dot_dimension_numbers<[1], [0], [0], [1], [0, 0, 1, 1], [], []>} : vector<2x32xf32>, vector<32x128xf32>, vector<2x128xf32> -> vector<2x128xf32>
    %87 = arith.addf %82, %86 : vector<2x128xf32>
    %88 = vector.extract_strided_slice %78 {offsets = [0, 2, 0], sizes = [2, 1, 32], strides = [1, 1, 1]} : vector<2x4x32xf32> to vector<2x1x32xf32>
    %89 = vector.shape_cast %88 : vector<2x1x32xf32> to vector<2x32xf32>
    %c64 = arith.constant 64 : index
    %c0_82 = arith.constant 0 : index
    %90 = vector.load %arg6[%c64, %c0_82] : memref<128x128xf32, #tpu.memory_space<vmem>>, vector<32x128xf32>
    %cst_83 = arith.constant dense<0.000000e+00> : vector<2x128xf32>
    %91 = tpu.matmul %89, %90, %cst_83 {dimension_numbers = #tpu.dot_dimension_numbers<[1], [0], [0], [1], [0, 0, 1, 1], [], []>} : vector<2x32xf32>, vector<32x128xf32>, vector<2x128xf32> -> vector<2x128xf32>
    %92 = arith.addf %87, %91 : vector<2x128xf32>
    %93 = vector.extract_strided_slice %78 {offsets = [0, 3, 0], sizes = [2, 1, 32], strides = [1, 1, 1]} : vector<2x4x32xf32> to vector<2x1x32xf32>
    %94 = vector.shape_cast %93 : vector<2x1x32xf32> to vector<2x32xf32>
    %c96 = arith.constant 96 : index
    %c0_84 = arith.constant 0 : index
    %95 = vector.load %arg6[%c96, %c0_84] : memref<128x128xf32, #tpu.memory_space<vmem>>, vector<32x128xf32>
    %cst_85 = arith.constant dense<0.000000e+00> : vector<2x128xf32>
    %96 = tpu.matmul %94, %95, %cst_85 {dimension_numbers = #tpu.dot_dimension_numbers<[1], [0], [0], [1], [0, 0, 1, 1], [], []>} : vector<2x32xf32>, vector<32x128xf32>, vector<2x128xf32> -> vector<2x128xf32>
    %97 = arith.addf %92, %96 : vector<2x128xf32>
    %c0_86 = arith.constant 0 : index
    %c0_87 = arith.constant 0 : index
    %98 = vector.load %arg7[%c0_86, %c0_87] : memref<1x128xf32, #tpu.memory_space<vmem>>, vector<1x128xf32>
    %99 = vector.broadcast %98 : vector<1x128xf32> to vector<2x128xf32>
    %100 = arith.addf %97, %99 : vector<2x128xf32>
    %cst_88 = arith.constant 0.000000e+00 : f32
    %101 = vector.broadcast %cst_88 : f32 to vector<2x128xf32>
    %102 = arith.maximumf %100, %101 : vector<2x128xf32>
    %c0_89 = arith.constant 0 : index
    %c0_90 = arith.constant 0 : index
    %103 = vector.load %arg8[%c0_89, %c0_90] : memref<128x128xf32, #tpu.memory_space<vmem>>, vector<128x128xf32>
    %cst_91 = arith.constant dense<0.000000e+00> : vector<2x128xf32>
    %104 = tpu.matmul %102, %103, %cst_91 {dimension_numbers = #tpu.dot_dimension_numbers<[1], [0], [0], [1], [0, 0, 1, 1], [], []>} : vector<2x128xf32>, vector<128x128xf32>, vector<2x128xf32> -> vector<2x128xf32>
    %c0_92 = arith.constant 0 : index
    %c0_93 = arith.constant 0 : index
    %105 = vector.load %arg9[%c0_92, %c0_93] : memref<1x128xf32, #tpu.memory_space<vmem>>, vector<1x128xf32>
    %106 = vector.broadcast %105 : vector<1x128xf32> to vector<2x128xf32>
    %107 = arith.addf %104, %106 : vector<2x128xf32>
    %c0_94 = arith.constant 0 : index
    %c0_95 = arith.constant 0 : index
    %108 = vector.load %arg10[%c0_94, %c0_95] : memref<2x128xf32, #tpu.memory_space<vmem>>, vector<2x128xf32>
    tpu.vector_store %arg10[%c0_94, %c0_95], %107 {strides = array<i32>} : memref<2x128xf32, #tpu.memory_space<vmem>>, vector<2x128xf32>,
    return
  }
  func.func @transform_0(%arg0: i32) -> (i32, i32, i32) {
    %c0_i32 = arith.constant 0 : i32
    %c0_i32_0 = arith.constant 0 : i32
    %c0_i32_1 = arith.constant 0 : i32
    return %arg0, %c0_i32, %c0_i32_0 : i32, i32, i32
  }
  func.func @transform_1(%arg0: i32) -> (i32, i32, i32) {
    %c0_i32 = arith.constant 0 : i32
    %c0_i32_0 = arith.constant 0 : i32
    %c0_i32_1 = arith.constant 0 : i32
    %c0_i32_2 = arith.constant 0 : i32
    return %c0_i32, %c0_i32_0, %c0_i32_1 : i32, i32, i32
  }
  func.func @transform_2(%arg0: i32) -> (i32, i32) {
    %c0_i32 = arith.constant 0 : i32
    %c0_i32_0 = arith.constant 0 : i32
    %c0_i32_1 = arith.constant 0 : i32
    return %c0_i32, %c0_i32_0 : i32, i32
  }
  func.func @transform_3(%arg0: i32) -> (i32, i32, i32) {
    %c0_i32 = arith.constant 0 : i32
    %c0_i32_0 = arith.constant 0 : i32
    %c0_i32_1 = arith.constant 0 : i32
    %c0_i32_2 = arith.constant 0 : i32
    return %c0_i32, %c0_i32_0, %c0_i32_1 : i32, i32, i32
  }
  func.func @transform_4(%arg0: i32) -> (i32, i32) {
    %c0_i32 = arith.constant 0 : i32
    %c0_i32_0 = arith.constant 0 : i32
    %c0_i32_1 = arith.constant 0 : i32
    return %c0_i32, %c0_i32_0 : i32, i32
  }
  func.func @transform_5(%arg0: i32) -> (i32, i32) {
    %c0_i32 = arith.constant 0 : i32
    %c0_i32_0 = arith.constant 0 : i32
    %c0_i32_1 = arith.constant 0 : i32
    return %c0_i32, %c0_i32_0 : i32, i32
  }
  func.func @transform_6(%arg0: i32) -> (i32, i32) {
    %c0_i32 = arith.constant 0 : i32
    %c0_i32_0 = arith.constant 0 : i32
    %c0_i32_1 = arith.constant 0 : i32
    return %c0_i32, %c0_i32_0 : i32, i32
  }
  func.func @transform_7(%arg0: i32) -> (i32, i32) {
    %c0_i32 = arith.constant 0 : i32
    %c0_i32_0 = arith.constant 0 : i32
    %c0_i32_1 = arith.constant 0 : i32
    return %c0_i32, %c0_i32_0 : i32, i32
  }
  func.func @transform_8(%arg0: i32) -> (i32, i32) {
    %c0_i32 = arith.constant 0 : i32
    %c0_i32_0 = arith.constant 0 : i32
    %c0_i32_1 = arith.constant 0 : i32
    return %c0_i32, %c0_i32_0 : i32, i32
  }
  func.func @transform_9(%arg0: i32) -> (i32, i32) {
    %c0_i32 = arith.constant 0 : i32
    %c0_i32_0 = arith.constant 0 : i32
    return %arg0, %c0_i32 : i32, i32
  }
}

</mosaic_0001>

<llo_original>
// kernel: _lambda_.1
$region0: #{_lambda_.1}
  #allocation0 [shape = 'u32[]', space=smem, size = 0x4, offset = 0x4, fixed_abs, tag = 'smem constant byte address 0x4 - core index']
  #allocation1 [shape = 'u32[144,128]{1,0:T(1,128)}', space=vmem, size = 0x12000, scoped, tag = 'internal scratch']
  #allocation2 [shape = 'f32[2,18,18]{2,1,0:T(8,128)}', space=vmem, size = 0x6000, scoped, tag = 'scratch operand']
  #allocation3 [shape = 'f32[2,10,40]{2,1,0:T(8,128)}', space=vmem, size = 0x4000, scoped, tag = 'scratch operand']
  %s0 = inlined_call_operand.hbm [shape: f32[2,16,16], index: 0, kind: input, shape index: {}]
  %s1 = inlined_call_operand.hbm [shape: f32[3,18,64], index: 1, kind: input, shape index: {}]
  %s2 = inlined_call_operand.vmem [shape: f32[1,64], index: 2, kind: input, shape index: {}]
  %s3 = inlined_call_operand.hbm [shape: f32[3,40,64], index: 3, kind: input, shape index: {}]
  %s4 = inlined_call_operand.vmem [shape: f32[1,64], index: 4, kind: input, shape index: {}]
  %s5 = inlined_call_operand.hbm [shape: f32[128,128], index: 5, kind: input, shape index: {}]
  %s6 = inlined_call_operand.vmem [shape: f32[1,128], index: 6, kind: input, shape index: {}]
  %s7 = inlined_call_operand.hbm [shape: f32[128,128], index: 7, kind: input, shape index: {}]
  %s8 = inlined_call_operand.vmem [shape: f32[1,128], index: 8, kind: input, shape index: {}]
  %s9 = inlined_call_operand.hbm [shape: f32[2,128], index: 9, kind: output, shape index: {}]
  %s10 = sld [smem:[#allocation0]]
  $region66: #{_lambda_.1} parent=0
    _
  %s12 = ssub.s32 1, %s10
  %s13 = scalar_select 0, %s12, %s10
  $region1: #{_lambda_.1} parent=0
    #allocation4 [shape = 'u8[16384]{0}', space=vmem, size = 0x4000, scoped, tag = 'input window, operand 0, single buffered']
    #allocation5 [shape = 's32[1]{0}', space=sflag, size = 0x4, scoped, tag = 'scoped memory for _lambda_.1']
    #allocation6 [shape = 's32[1]{0}', space=sflag, size = 0x4, scoped, tag = 'scoped memory for _lambda_.1']
    #allocation7 [shape = 'u8[36864]{0}', space=vmem, size = 0x9000, scoped, tag = 'input window, operand 1, single buffered']
    #allocation8 [shape = 's32[1]{0}', space=sflag, size = 0x4, scoped, tag = 'scoped memory for _lambda_.1']
    #allocation9 [shape = 'u8[61440]{0}', space=vmem, size = 0xf000, scoped, tag = 'input window, operand 3, single buffered']
    #allocation10 [shape = 'u8[65536]{0}', space=vmem, size = 0x10000, scoped, tag = 'input window, operand 5, single buffered']
    #allocation11 [shape = 's32[1]{0}', space=sflag, size = 0x4, scoped, tag = 'scoped memory for _lambda_.1']
    #allocation12 [shape = 'u8[65536]{0}', space=vmem, size = 0x10000, scoped, tag = 'input window, operand 7, single buffered']
    #allocation13 [shape = 'u8[1024]{0}', space=vmem, size = 0x400, scoped, tag = 'output window, operand 0, single buffered']
    %14 = vsyncpa [#allocation5], 0
    %15 = vsyncpa [#allocation8], 0
    %16 = vsyncpa [#allocation11], 0
    %17 = vsyncpa [#allocation6], 0
    // Predicated region
    $region2: #{_lambda_.1} parent=1 // pred_check
      _
    $region3: #{_lambda_.1} parent=1 // pred_check_branch
      %19 = sbr.rel (0) target = $region5
    $region4: #{_lambda_.1} parent=1 // pred_region
      %s21 = ssub.s32 512, 512
      %22 = vsyncadd [#allocation5], %s21
      %s23 = sshll.u32 [#allocation4], 4
      %s24 = int_to_ptr.vmem [resolvable:$true] %s23
      %29 = dma.hbm_to_vmem [thread:$0]  %s0, 512, %s24, [#allocation5], 128, 128, 8
    $region5: #{_lambda_.1} parent=1 // pred_fallthru
      _
    // Predicated region
    $region6: #{_lambda_.1} parent=1 // pred_check
      _
    $region7: #{_lambda_.1} parent=1 // pred_check_branch
      %31 = sbr.rel (0) target = $region9
    $region8: #{_lambda_.1} parent=1 // pred_region
      %s33 = ssub.s32 1152, 1152
      %34 = vsyncadd [#allocation8], %s33
      %s35 = sshll.u32 [#allocation7], 4
      %s36 = int_to_ptr.vmem [resolvable:$true] %s35
      %41 = dma.hbm_to_vmem [thread:$0]  %s1, 1152, %s36, [#allocation8], 128, 128, 8
    $region9: #{_lambda_.1} parent=1 // pred_fallthru
      _
    // Predicated region
    $region10: #{_lambda_.1} parent=1 // pred_check
      _
    $region11: #{_lambda_.1} parent=1 // pred_check_branch
      %43 = sbr.rel (0) target = $region13
    $region12: #{_lambda_.1} parent=1 // pred_region
      _
    $region13: #{_lambda_.1} parent=1 // pred_fallthru
      _
    // Predicated region
    $region14: #{_lambda_.1} parent=1 // pred_check
      _
    $region15: #{_lambda_.1} parent=1 // pred_check_branch
      %45 = sbr.rel (0) target = $region17
    $region16: #{_lambda_.1} parent=1 // pred_region
      %s47 = ssub.s32 1920, 1920
      %48 = vsyncadd [#allocation8], %s47
      %s49 = sshll.u32 [#allocation9], 4
      %s50 = int_to_ptr.vmem [resolvable:$true] %s49
      %55 = dma.hbm_to_vmem [thread:$0]  %s3, 1920, %s50, [#allocation8], 128, 128, 8
    $region17: #{_lambda_.1} parent=1 // pred_fallthru
      _
    // Predicated region
    $region18: #{_lambda_.1} parent=1 // pred_check
      _
    $region19: #{_lambda_.1} parent=1 // pred_check_branch
      %57 = sbr.rel (0) target = $region21
    $region20: #{_lambda_.1} parent=1 // pred_region
      _
    $region21: #{_lambda_.1} parent=1 // pred_fallthru
      _
    // Predicated region
    $region22: #{_lambda_.1} parent=1 // pred_check
      _
    $region23: #{_lambda_.1} parent=1 // pred_check_branch
      %59 = sbr.rel (0) target = $region25
    $region24: #{_lambda_.1} parent=1 // pred_region
      %s61 = ssub.s32 2048, 2048
      %62 = vsyncadd [#allocation11], %s61
      %s63 = sshll.u32 [#allocation10], 4
      %s64 = int_to_ptr.vmem [resolvable:$true] %s63
      %69 = dma.hbm_to_vmem [thread:$0]  %s5, 2048, %s64, [#allocation11], 128, 128, 8
    $region25: #{_lambda_.1} parent=1 // pred_fallthru
      _
    // Predicated region
    $region26: #{_lambda_.1} parent=1 // pred_check
      _
    $region27: #{_lambda_.1} parent=1 // pred_check_branch
      %71 = sbr.rel (0) target = $region29
    $region28: #{_lambda_.1} parent=1 // pred_region
      _
    $region29: #{_lambda_.1} parent=1 // pred_fallthru
      _
    // Predicated region
    $region30: #{_lambda_.1} parent=1 // pred_check
      _
    $region31: #{_lambda_.1} parent=1 // pred_check_branch
      %73 = sbr.rel (0) target = $region33
    $region32: #{_lambda_.1} parent=1 // pred_region
      %s75 = ssub.s32 2048, 2048
      %76 = vsyncadd [#allocation11], %s75
      %s77 = sshll.u32 [#allocation12], 4
      %s78 = int_to_ptr.vmem [resolvable:$true] %s77
      %83 = dma.hbm_to_vmem [thread:$0]  %s7, 2048, %s78, [#allocation11], 128, 128, 8
    $region33: #{_lambda_.1} parent=1 // pred_fallthru
      _
    // Predicated region
    $region34: #{_lambda_.1} parent=1 // pred_check
      _
    $region35: #{_lambda_.1} parent=1 // pred_check_branch
      %85 = sbr.rel (0) target = $region37
    $region36: #{_lambda_.1} parent=1 // pred_region
      _
    $region37: #{_lambda_.1} parent=1 // pred_fallthru
      _
    // Predicated region
    $region38: #{_lambda_.1} parent=1 // pred_check
      _
    $region39: #{_lambda_.1} parent=1 // pred_check_branch
      %87 = sbr.rel (0) target = $region41
    $region40: #{_lambda_.1} parent=1 // pred_region
      %88 = dma.done [#allocation5], 512
    $region41: #{_lambda_.1} parent=1 // pred_fallthru
      _
    // Predicated region
    $region42: #{_lambda_.1} parent=1 // pred_check
      _
    $region43: #{_lambda_.1} parent=1 // pred_check_branch
      %90 = sbr.rel (0) target = $region45
    $region44: #{_lambda_.1} parent=1 // pred_region
      %91 = dma.done [#allocation8], 1152
    $region45: #{_lambda_.1} parent=1 // pred_fallthru
      _
    // Predicated region
    $region46: #{_lambda_.1} parent=1 // pred_check
      _
    $region47: #{_lambda_.1} parent=1 // pred_check_branch
      %93 = sbr.rel (0) target = $region49
    $region48: #{_lambda_.1} parent=1 // pred_region
      %94 = dma.done [#allocation8], 1920
    $region49: #{_lambda_.1} parent=1 // pred_fallthru
      _
    // Predicated region
    $region50: #{_lambda_.1} parent=1 // pred_check
      _
    $region51: #{_lambda_.1} parent=1 // pred_check_branch
      %96 = sbr.rel (0) target = $region53
    $region52: #{_lambda_.1} parent=1 // pred_region
      %97 = dma.done [#allocation11], 2048
    $region53: #{_lambda_.1} parent=1 // pred_fallthru
      _
    // Predicated region
    $region54: #{_lambda_.1} parent=1 // pred_check
      _
    $region55: #{_lambda_.1} parent=1 // pred_check_branch
      %99 = sbr.rel (0) target = $region57
    $region56: #{_lambda_.1} parent=1 // pred_region
      %100 = dma.done [#allocation11], 2048
    $region57: #{_lambda_.1} parent=1 // pred_fallthru
      _
    %v101 = vld [vmem:[#allocation4] sm:$0xff]
    %v102 = vld [vmem:[#allocation4 + $0x8] sm:$0xff]
    %v103 = vld [vmem:[#allocation4 + $0x10] sm:$0xff]
    %v104 = vld [vmem:[#allocation4 + $0x18] sm:$0xff]
    %109 = vrot.lane.b32.xlu0 %v101, 1
    %v110 = vpop.permute.xlu0 %109
    %111 = vrot.lane.b32.xlu0 %v102, 1
    %v112 = vpop.permute.xlu0 %111
    %113 = vrot.lane.b32.xlu0 %v103, 1
    %v114 = vpop.permute.xlu0 %113
    %115 = vrot.lane.b32.xlu0 %v104, 1
    %v116 = vpop.permute.xlu0 %115
    %vm121 = vcmask 138248
    %122 = vst.msk [vmem:[#allocation2 + $0x1] sm:$0xff] %vm121, %v110
    %123 = vst.msk [vmem:[#allocation2 + $0x9] sm:$0xff] %vm121, %v112
    %124 = vst.msk [vmem:[#allocation2 + $0x19] sm:$0xff] %vm121, %v114
    %125 = vst.msk [vmem:[#allocation2 + $0x21] sm:$0xff] %vm121, %v116
    %vm126 = vcmask 139264
    %127 = vst.msk [vmem:[#allocation2] sm:$0x1] %vm126, 0.0
    %128 = vst.msk [vmem:[#allocation2 + $0x18] sm:$0x1] %vm126, 0.0
    %129 = vst.msk [vmem:[#allocation2 + $0x11] sm:$0x1] %vm126, 0.0
    %130 = vst.msk [vmem:[#allocation2 + $0x29] sm:$0x1] %vm126, 0.0
    %vm131 = vcmask 7168
    %132 = vst.msk [vmem:[#allocation2 + $0x1] sm:$0xff] %vm131, 0.0
    %133 = vst.msk [vmem:[#allocation2 + $0x9] sm:$0xff] %vm131, 0.0
    %134 = vst.msk [vmem:[#allocation2 + $0x19] sm:$0xff] %vm131, 0.0
    %135 = vst.msk [vmem:[#allocation2 + $0x21] sm:$0xff] %vm131, 0.0
    %vm136 = vcmask 146568
    %137 = vst.msk [vmem:[#allocation2 + $0x1] sm:$0xff] %vm136, 0.0
    %138 = vst.msk [vmem:[#allocation2 + $0x9] sm:$0xff] %vm136, 0.0
    %139 = vst.msk [vmem:[#allocation2 + $0x19] sm:$0xff] %vm136, 0.0
    %140 = vst.msk [vmem:[#allocation2 + $0x21] sm:$0xff] %vm136, 0.0
    %v141 = vld [vmem:[#allocation2] sm:$0xff]
    %v142 = vld [vmem:[#allocation2 + $0x8] sm:$0xff]
    %v143 = vld [vmem:[#allocation2 + $0x18] sm:$0xff]
    %v144 = vld [vmem:[#allocation2 + $0x20] sm:$0xff]
    %v145 = vld [vmem:[#allocation7] sm:$0xff]
    %v146 = vld [vmem:[#allocation7 + $0x8] sm:$0xff]
    %v147 = vld [vmem:[#allocation7 + $0x10] sm:$0x3]
    %v148 = vld [vmem:[#allocation2 + $0x1] sm:$0xff]
    %v149 = vld [vmem:[#allocation2 + $0x9] sm:$0xff]
    %v150 = vld [vmem:[#allocation2 + $0x19] sm:$0xff]
    %v151 = vld [vmem:[#allocation2 + $0x21] sm:$0xff]
    %s152 = scalar_lea.vmem [#allocation7], 24
    %v153 = vld [vmem:[%s152] sm:$0xff]
    %v154 = vld [vmem:[%s152 + $0x8] sm:$0xff]
    %v155 = vld [vmem:[%s152 + $0x10] sm:$0x3]
    %vm156 = vcmask 146432
    %v158 = vsel %vm156, %v148, 0
    %v161 = vsel %vm156, %v149, 0
    %v164 = vsel %vm156, %v150, 0
    %v167 = vsel %vm156, %v151, 0
    %vm169 = vcmask 1041408
    %v171 = vsel %vm169, %v155, 0
    %173 = vmatprep.subr.mxu0 0.0
    %174 = vmatpush1.msra.mxu0 %v153
    %175 = vmatprep.subr.mxu0 0.0
    %176 = vmatpush1.msra.mxu0 %v154
    %177 = vmatprep.subr.mxu0 0.0
    %178 = vmatpush1.msra.mxu0 %v171
    %179 = vmatprep.subr.mxu0 0.0
    %180 = vmatpush1.msra.mxu0 0.0
    %181 = vmatprep.subr.mxu0 0.0
    %182 = vmatpush1.msra.mxu0 0.0
    %183 = vmatprep.subr.mxu0 0.0
    %184 = vmatpush1.msra.mxu0 0.0
    %185 = vmatprep.subr.mxu0 0.0
    %186 = vmatpush1.msra.mxu0 0.0
    %187 = vmatprep.subr.mxu0 0.0
    %188 = vmatpush1.msra.mxu0 0.0
    %189 = vmatprep.subr.mxu0 0.0
    %190 = vmatpush1.msra.mxu0 0.0
    %191 = vmatprep.subr.mxu0 0.0
    %192 = vmatpush1.msra.mxu0 0.0
    %193 = vmatprep.subr.mxu0 0.0
    %194 = vmatpush1.msra.mxu0 0.0
    %195 = vmatprep.subr.mxu0 0.0
    %196 = vmatpush1.msra.mxu0 0.0
    %197 = vmatprep.subr.mxu0 0.0
    %198 = vmatpush1.msra.mxu0 0.0
    %199 = vmatprep.subr.mxu0 0.0
    %200 = vmatpush1.msra.mxu0 0.0
    %201 = vmatprep.subr.mxu0 0.0
    %202 = vmatpush1.msra.mxu0 0.0
    %203 = vmatprep.subr.mxu0 0.0
    %204 = vmatpush1.msra.mxu0 0.0
    %205 = vmatprep.subr.mxu0 0.0
    %206 = vmatpush1.msra.mxu0 0.0
    %207 = vmatprep.subr.mxu0 0.0
    %208 = vmatpush1.msra.mxu0 0.0
    %209 = vmatprep.subr.mxu0 0.0
    %210 = vmatpush1.msra.mxu0 0.0
    %211 = vmatprep.subr.mxu0 0.0
    %212 = vmatpush1.msra.mxu0 0.0
    %213 = vmatprep.subr.mxu0 0.0
    %214 = vmatpush1.msra.mxu0 0.0
    %215 = vmatprep.subr.mxu0 0.0
    %216 = vmatpush1.msra.mxu0 0.0
    %217 = vmatprep.subr.mxu0 0.0
    %218 = vmatpush1.msra.mxu0 0.0
    %219 = vmatprep.subr.mxu0 0.0
    %220 = vmatpush1.msra.mxu0 0.0
    %221 = vmatprep.subr.mxu0 0.0
    %222 = vmatpush1.msra.mxu0 0.0
    %223 = vmatprep.subr.mxu0 0.0
    %224 = vmatpush1.msra.mxu0 0.0
    %225 = vmatprep.subr.mxu0 0.0
    %226 = vmatpush1.msra.mxu0 0.0
    %227 = vmatprep.subr.mxu0 0.0
    %228 = vmatpush1.msra.mxu0 0.0
    %229 = vmatprep.subr.mxu0 0.0
    %230 = vmatpush1.msra.mxu0 0.0
    %231 = vmatprep.subr.mxu0 0.0
    %232 = vmatpush1.msra.mxu0 0.0
    %233 = vmatprep.subr.mxu0 0.0
    %234 = vmatpush1.msra.mxu0 0.0
    %235 = vmatprep.subr.mxu0 0.0
    %236 = vmatpush1.msra.mxu0 0.0
    %237 = vmatprep.mubr.f32.mxu0 0.0
    %238 = vmatmul.mubr.f32.gmra.mrb[0].mxu0 %v158
    %v239 = vpop.f32.mrb[0].mxu0
    %v240 = vadd.f32 0.0, %v239
    %v241 = vpop.f32.mrb[0].mxu0
    %242 = vmatprep.mubr.f32.mxu0 0.0
    %243 = vmatmul.mubr.f32.gmra.mrb[0].mxu0 %v161
    %v244 = vpop.f32.mrb[0].mxu0
    %v245 = vadd.f32 0.0, %v244
    %v246 = vpop.f32.mrb[0].mxu0
    %247 = vmatprep.mubr.f32.mxu0 0.0
    %248 = vmatmul.mubr.f32.gmra.mrb[0].mxu0 %v164
    %v249 = vpop.f32.mrb[0].mxu0
    %v250 = vadd.f32 0.0, %v249
    %v251 = vpop.f32.mrb[0].mxu0
    %252 = vmatprep.mubr.f32.mxu0 0.0
    %253 = vmatmul.mubr.f32.gmra.mrb[0].mxu0 %v167
    %v254 = vpop.f32.mrb[0].mxu0
    %v255 = vadd.f32 0.0, %v254
    %v256 = vpop.f32.mrb[0].mxu0
    %257 = vdwg.mxu0
    %v259 = vsel %vm156, %v141, 0
    %v262 = vsel %vm156, %v142, 0
    %v265 = vsel %vm156, %v143, 0
    %v268 = vsel %vm156, %v144, 0
    %v271 = vsel %vm169, %v147, 0
    %273 = vmatprep.subr.mxu0 0.0
    %274 = vmatpush1.msra.mxu0 %v145
    %275 = vmatprep.subr.mxu0 0.0
    %276 = vmatpush1.msra.mxu0 %v146
    %277 = vmatprep.subr.mxu0 0.0
    %278 = vmatpush1.msra.mxu0 %v271
    %279 = vmatprep.subr.mxu0 0.0
    %280 = vmatpush1.msra.mxu0 0.0
    %281 = vmatprep.subr.mxu0 0.0
    %282 = vmatpush1.msra.mxu0 0.0
    %283 = vmatprep.subr.mxu0 0.0
    %284 = vmatpush1.msra.mxu0 0.0
    %285 = vmatprep.subr.mxu0 0.0
    %286 = vmatpush1.msra.mxu0 0.0
    %287 = vmatprep.subr.mxu0 0.0
    %288 = vmatpush1.msra.mxu0 0.0
    %289 = vmatprep.subr.mxu0 0.0
    %290 = vmatpush1.msra.mxu0 0.0
    %291 = vmatprep.subr.mxu0 0.0
    %292 = vmatpush1.msra.mxu0 0.0
    %293 = vmatprep.subr.mxu0 0.0
    %294 = vmatpush1.msra.mxu0 0.0
    %295 = vmatprep.subr.mxu0 0.0
    %296 = vmatpush1.msra.mxu0 0.0
    %297 = vmatprep.subr.mxu0 0.0
    %298 = vmatpush1.msra.mxu0 0.0
    %299 = vmatprep.subr.mxu0 0.0
    %300 = vmatpush1.msra.mxu0 0.0
    %301 = vmatprep.subr.mxu0 0.0
    %302 = vmatpush1.msra.mxu0 0.0
    %303 = vmatprep.subr.mxu0 0.0
    %304 = vmatpush1.msra.mxu0 0.0
    %305 = vmatprep.subr.mxu0 0.0
    %306 = vmatpush1.msra.mxu0 0.0
    %307 = vmatprep.subr.mxu0 0.0
    %308 = vmatpush1.msra.mxu0 0.0
    %309 = vmatprep.subr.mxu0 0.0
    %310 = vmatpush1.msra.mxu0 0.0
    %311 = vmatprep.subr.mxu0 0.0
    %312 = vmatpush1.msra.mxu0 0.0
    %313 = vmatprep.subr.mxu0 0.0
    %314 = vmatpush1.msra.mxu0 0.0
    %315 = vmatprep.subr.mxu0 0.0
    %316 = vmatpush1.msra.mxu0 0.0
    %317 = vmatprep.subr.mxu0 0.0
    %318 = vmatpush1.msra.mxu0 0.0
    %319 = vmatprep.subr.mxu0 0.0
    %320 = vmatpush1.msra.mxu0 0.0
    %321 = vmatprep.subr.mxu0 0.0
    %322 = vmatpush1.msra.mxu0 0.0
    %323 = vmatprep.subr.mxu0 0.0
    %324 = vmatpush1.msra.mxu0 0.0
    %325 = vmatprep.subr.mxu0 0.0
    %326 = vmatpush1.msra.mxu0 0.0
    %327 = vmatprep.subr.mxu0 0.0
    %328 = vmatpush1.msra.mxu0 0.0
    %329 = vmatprep.subr.mxu0 0.0
    %330 = vmatpush1.msra.mxu0 0.0
    %331 = vmatprep.subr.mxu0 0.0
    %332 = vmatpush1.msra.mxu0 0.0
    %333 = vmatprep.subr.mxu0 0.0
    %334 = vmatpush1.msra.mxu0 0.0
    %335 = vmatprep.subr.mxu0 0.0
    %336 = vmatpush1.msra.mxu0 0.0
    %337 = vmatprep.mubr.f32.mxu0 0.0
    %338 = vmatmul.mubr.f32.gmra.mrb[0].mxu0 %v259
    %v339 = vpop.f32.mrb[0].mxu0
    %v340 = vadd.f32 %v240, %v339
    %v341 = vpop.f32.mrb[0].mxu0
    %342 = vmatprep.mubr.f32.mxu0 0.0
    %343 = vmatmul.mubr.f32.gmra.mrb[0].mxu0 %v262
    %v344 = vpop.f32.mrb[0].mxu0
    %v345 = vadd.f32 %v245, %v344
    %v346 = vpop.f32.mrb[0].mxu0
    %347 = vmatprep.mubr.f32.mxu0 0.0
    %348 = vmatmul.mubr.f32.gmra.mrb[0].mxu0 %v265
    %v349 = vpop.f32.mrb[0].mxu0
    %v350 = vadd.f32 %v250, %v349
    %v351 = vpop.f32.mrb[0].mxu0
    %352 = vmatprep.mubr.f32.mxu0 0.0
    %353 = vmatmul.mubr.f32.gmra.mrb[0].mxu0 %v268
    %v354 = vpop.f32.mrb[0].mxu0
    %v355 = vadd.f32 %v255, %v354
    %v356 = vpop.f32.mrb[0].mxu0
    %357 = vdwg.mxu0
    %v358 = vld [vmem:[#allocation2 + $0x2] sm:$0xff]
    %v359 = vld [vmem:[#allocation2 + $0xa] sm:$0xff]
    %v360 = vld [vmem:[#allocation2 + $0x1a] sm:$0xff]
    %v361 = vld [vmem:[#allocation2 + $0x22] sm:$0xff]
    %s362 = scalar_lea.vmem [#allocation7], 48
    %v363 = vld [vmem:[%s362] sm:$0xff]
    %v364 = vld [vmem:[%s362 + $0x8] sm:$0xff]
    %v365 = vld [vmem:[%s362 + $0x10] sm:$0x3]
    %v367 = vsel %vm156, %v358, 0
    %v370 = vsel %vm156, %v359, 0
    %v373 = vsel %vm156, %v360, 0
    %v376 = vsel %vm156, %v361, 0
    %v379 = vsel %vm169, %v365, 0
    %381 = vmatprep.subr.mxu0 0.0
    %382 = vmatpush1.msra.mxu0 %v363
    %383 = vmatprep.subr.mxu0 0.0
    %384 = vmatpush1.msra.mxu0 %v364
    %385 = vmatprep.subr.mxu0 0.0
    %386 = vmatpush1.msra.mxu0 %v379
    %387 = vmatprep.subr.mxu0 0.0
    %388 = vmatpush1.msra.mxu0 0.0
    %389 = vmatprep.subr.mxu0 0.0
    %390 = vmatpush1.msra.mxu0 0.0
    %391 = vmatprep.subr.mxu0 0.0
    %392 = vmatpush1.msra.mxu0 0.0
    %393 = vmatprep.subr.mxu0 0.0
    %394 = vmatpush1.msra.mxu0 0.0
    %395 = vmatprep.subr.mxu0 0.0
    %396 = vmatpush1.msra.mxu0 0.0
    %397 = vmatprep.subr.mxu0 0.0
    %398 = vmatpush1.msra.mxu0 0.0
    %399 = vmatprep.subr.mxu0 0.0
    %400 = vmatpush1.msra.mxu0 0.0
    %401 = vmatprep.subr.mxu0 0.0
    %402 = vmatpush1.msra.mxu0 0.0
    %403 = vmatprep.subr.mxu0 0.0
    %404 = vmatpush1.msra.mxu0 0.0
    %405 = vmatprep.subr.mxu0 0.0
    %406 = vmatpush1.msra.mxu0 0.0
    %407 = vmatprep.subr.mxu0 0.0
    %408 = vmatpush1.msra.mxu0 0.0
    %409 = vmatprep.subr.mxu0 0.0
    %410 = vmatpush1.msra.mxu0 0.0
    %411 = vmatprep.subr.mxu0 0.0
    %412 = vmatpush1.msra.mxu0 0.0
    %413 = vmatprep.subr.mxu0 0.0
    %414 = vmatpush1.msra.mxu0 0.0
    %415 = vmatprep.subr.mxu0 0.0
    %416 = vmatpush1.msra.mxu0 0.0
    %417 = vmatprep.subr.mxu0 0.0
    %418 = vmatpush1.msra.mxu0 0.0
    %419 = vmatprep.subr.mxu0 0.0
    %420 = vmatpush1.msra.mxu0 0.0
    %421 = vmatprep.subr.mxu0 0.0
    %422 = vmatpush1.msra.mxu0 0.0
    %423 = vmatprep.subr.mxu0 0.0
    %424 = vmatpush1.msra.mxu0 0.0
    %425 = vmatprep.subr.mxu0 0.0
    %426 = vmatpush1.msra.mxu0 0.0
    %427 = vmatprep.subr.mxu0 0.0
    %428 = vmatpush1.msra.mxu0 0.0
    %429 = vmatprep.subr.mxu0 0.0
    %430 = vmatpush1.msra.mxu0 0.0
    %431 = vmatprep.subr.mxu0 0.0
    %432 = vmatpush1.msra.mxu0 0.0
    %433 = vmatprep.subr.mxu0 0.0
    %434 = vmatpush1.msra.mxu0 0.0
    %435 = vmatprep.subr.mxu0 0.0
    %436 = vmatpush1.msra.mxu0 0.0
    %437 = vmatprep.subr.mxu0 0.0
    %438 = vmatpush1.msra.mxu0 0.0
    %439 = vmatprep.subr.mxu0 0.0
    %440 = vmatpush1.msra.mxu0 0.0
    %441 = vmatprep.subr.mxu0 0.0
    %442 = vmatpush1.msra.mxu0 0.0
    %443 = vmatprep.subr.mxu0 0.0
    %444 = vmatpush1.msra.mxu0 0.0
    %445 = vmatprep.mubr.f32.mxu0 0.0
    %446 = vmatmul.mubr.f32.gmra.mrb[0].mxu0 %v367
    %v447 = vpop.f32.mrb[0].mxu0
    %v448 = vadd.f32 0.0, %v447
    %v449 = vpop.f32.mrb[0].mxu0
    %450 = vmatprep.mubr.f32.mxu0 0.0
    %451 = vmatmul.mubr.f32.gmra.mrb[0].mxu0 %v370
    %v452 = vpop.f32.mrb[0].mxu0
    %v453 = vadd.f32 0.0, %v452
    %v454 = vpop.f32.mrb[0].mxu0
    %455 = vmatprep.mubr.f32.mxu0 0.0
    %456 = vmatmul.mubr.f32.gmra.mrb[0].mxu0 %v373
    %v457 = vpop.f32.mrb[0].mxu0
    %v458 = vadd.f32 0.0, %v457
    %v459 = vpop.f32.mrb[0].mxu0
    %460 = vmatprep.mubr.f32.mxu0 0.0
    %461 = vmatmul.mubr.f32.gmra.mrb[0].mxu0 %v376
    %v462 = vpop.f32.mrb[0].mxu0
    %v463 = vadd.f32 0.0, %v462
    %v464 = vpop.f32.mrb[0].mxu0
    %465 = vdwg.mxu0
    %v466 = vadd.f32 %v340, %v448
    %v467 = vadd.f32 %v345, %v453
    %v468 = vadd.f32 %v350, %v458
    %v469 = vadd.f32 %v355, %v463
    %v470 = vld [vmem:[%s2] sm:$0x1]
    %v472 = vlaneseq
    %v473 = vshrl.u32 %v472, 7
    %v474 = vsub.s32 0, %v473
    %v475 = vrot.slane %v470, %v474
    %v477 = vadd.f32 %v466, %v475
    %v478 = vadd.f32 %v467, %v475
    %v479 = vadd.f32 %v468, %v475
    %v480 = vadd.f32 %v469, %v475
    %v481 = vmax.f32 %v477, 0.0
    %v482 = vmax.f32 %v478, 0.0
    %v483 = vmax.f32 %v479, 0.0
    %v484 = vmax.f32 %v480, 0.0
    %v489 = vcombine.high %v481, %v481
    %v491 = vunpack.c.l.s4 1983009808
    %v492 = vunpack.c.0.s8 %v491
    %v493 = vlaneseq
    %v494 = vshrl.u32 %v493, 7
    %v495 = vsub.s32 %v492, %v494
    %v496 = vrot.slane %v481, %v495
    %v498 = vunpack.c.l.s4 1983009808
    %v499 = vunpack.c.0.s8 %v498
    %v500 = vlaneseq
    %v501 = vshrl.u32 %v500, 7
    %v502 = vsub.s32 %v499, %v501
    %v503 = vrot.slane %v489, %v502
    %v504 = vcombine.high %v496, %v496
    %v505 = vcombine.high %v503, %v503
    %v506 = vcombine.high %v482, %v482
    %v508 = vunpack.c.l.s4 1983009808
    %v509 = vunpack.c.0.s8 %v508
    %v510 = vlaneseq
    %v511 = vshrl.u32 %v510, 7
    %v512 = vsub.s32 %v509, %v511
    %v513 = vrot.slane %v482, %v512
    %v515 = vunpack.c.l.s4 1983009808
    %v516 = vunpack.c.0.s8 %v515
    %v517 = vlaneseq
    %v518 = vshrl.u32 %v517, 7
    %v519 = vsub.s32 %v516, %v518
    %v520 = vrot.slane %v506, %v519
    %v521 = vcombine.high %v513, %v513
    %v522 = vcombine.high %v520, %v520
    %v523 = vcombine.high %v483, %v483
    %v525 = vunpack.c.l.s4 1983009808
    %v526 = vunpack.c.0.s8 %v525
    %v527 = vlaneseq
    %v528 = vshrl.u32 %v527, 7
    %v529 = vsub.s32 %v526, %v528
    %v530 = vrot.slane %v483, %v529
    %v532 = vunpack.c.l.s4 1983009808
    %v533 = vunpack.c.0.s8 %v532
    %v534 = vlaneseq
    %v535 = vshrl.u32 %v534, 7
    %v536 = vsub.s32 %v533, %v535
    %v537 = vrot.slane %v523, %v536
    %v538 = vcombine.high %v530, %v530
    %v539 = vcombine.high %v537, %v537
    %v540 = vcombine.high %v484, %v484
    %v542 = vunpack.c.l.s4 1983009808
    %v543 = vunpack.c.0.s8 %v542
    %v544 = vlaneseq
    %v545 = vshrl.u32 %v544, 7
    %v546 = vsub.s32 %v543, %v545
    %v547 = vrot.slane %v484, %v546
    %v549 = vunpack.c.l.s4 1983009808
    %v550 = vunpack.c.0.s8 %v549
    %v551 = vlaneseq
    %v552 = vshrl.u32 %v551, 7
    %v553 = vsub.s32 %v550, %v552
    %v554 = vrot.slane %v540, %v553
    %v555 = vcombine.high %v547, %v547
    %v556 = vcombine.high %v554, %v554
    %v573 = vrot.slane %v496, 7
    %v574 = vrot.slane %v573, 2
    %v575 = vrot.slane %v504, 7
    %v576 = vrot.slane %v575, 2
    %v577 = vrot.slane %v503, 7
    %v578 = vrot.slane %v577, 2
    %v579 = vrot.slane %v505, 7
    %v580 = vrot.slane %v579, 2
    %v581 = vrot.slane %v513, 7
    %v582 = vrot.slane %v581, 2
    %v583 = vrot.slane %v521, 7
    %v584 = vrot.slane %v583, 2
    %v585 = vrot.slane %v520, 7
    %v586 = vrot.slane %v585, 2
    %v587 = vrot.slane %v522, 7
    %v588 = vrot.slane %v587, 2
    %v589 = vrot.slane %v530, 7
    %v590 = vrot.slane %v589, 2
    %v591 = vrot.slane %v538, 7
    %v592 = vrot.slane %v591, 2
    %v593 = vrot.slane %v537, 7
    %v594 = vrot.slane %v593, 2
    %v595 = vrot.slane %v539, 7
    %v596 = vrot.slane %v595, 2
    %v597 = vrot.slane %v547, 7
    %v598 = vrot.slane %v597, 2
    %v599 = vrot.slane %v555, 7
    %v600 = vrot.slane %v599, 2
    %v601 = vrot.slane %v554, 7
    %v602 = vrot.slane %v601, 2
    %v603 = vrot.slane %v556, 7
    %v604 = vrot.slane %v603, 2
    %v621 = vmax.f32 %v496, %v574
    %v622 = vmax.f32 %v504, %v576
    %v623 = vmax.f32 %v503, %v578
    %v624 = vmax.f32 %v505, %v580
    %v625 = vmax.f32 %v513, %v582
    %v626 = vmax.f32 %v521, %v584
    %v627 = vmax.f32 %v520, %v586
    %v628 = vmax.f32 %v522, %v588
    %v629 = vmax.f32 %v530, %v590
    %v630 = vmax.f32 %v538, %v592
    %v631 = vmax.f32 %v537, %v594
    %v632 = vmax.f32 %v539, %v596
    %v633 = vmax.f32 %v547, %v598
    %v634 = vmax.f32 %v555, %v600
    %v635 = vmax.f32 %v554, %v602
    %v636 = vmax.f32 %v556, %v604
    %653 = vrot.lane.b32.xlu0 %v621, 96
    %v654 = vpop.permute.xlu0 %653
    %655 = vrot.lane.b32.xlu0 %v622, 96
    %v656 = vpop.permute.xlu0 %655
    %657 = vrot.lane.b32.xlu0 %v623, 96
    %v658 = vpop.permute.xlu0 %657
    %659 = vrot.lane.b32.xlu0 %v624, 96
    %v660 = vpop.permute.xlu0 %659
    %661 = vrot.lane.b32.xlu0 %v625, 96
    %v662 = vpop.permute.xlu0 %661
    %663 = vrot.lane.b32.xlu0 %v626, 96
    %v664 = vpop.permute.xlu0 %663
    %665 = vrot.lane.b32.xlu0 %v627, 96
    %v666 = vpop.permute.xlu0 %665
    %667 = vrot.lane.b32.xlu0 %v628, 96
    %v668 = vpop.permute.xlu0 %667
    %669 = vrot.lane.b32.xlu0 %v629, 96
    %v670 = vpop.permute.xlu0 %669
    %671 = vrot.lane.b32.xlu0 %v630, 96
    %v672 = vpop.permute.xlu0 %671
    %673 = vrot.lane.b32.xlu0 %v631, 96
    %v674 = vpop.permute.xlu0 %673
    %675 = vrot.lane.b32.xlu0 %v632, 96
    %v676 = vpop.permute.xlu0 %675
    %677 = vrot.lane.b32.xlu0 %v633, 96
    %v678 = vpop.permute.xlu0 %677
    %679 = vrot.lane.b32.xlu0 %v634, 96
    %v680 = vpop.permute.xlu0 %679
    %681 = vrot.lane.b32.xlu0 %v635, 96
    %v682 = vpop.permute.xlu0 %681
    %683 = vrot.lane.b32.xlu0 %v636, 96
    %v684 = vpop.permute.xlu0 %683
    %v701 = vmax.f32 %v621, %v654
    %v702 = vmax.f32 %v622, %v656
    %v703 = vmax.f32 %v623, %v658
    %v704 = vmax.f32 %v624, %v660
    %v705 = vmax.f32 %v625, %v662
    %v706 = vmax.f32 %v626, %v664
    %v707 = vmax.f32 %v627, %v666
    %v708 = vmax.f32 %v628, %v668
    %v709 = vmax.f32 %v629, %v670
    %v710 = vmax.f32 %v630, %v672
    %v711 = vmax.f32 %v631, %v674
    %v712 = vmax.f32 %v632, %v676
    %v713 = vmax.f32 %v633, %v678
    %v714 = vmax.f32 %v634, %v680
    %v715 = vmax.f32 %v635, %v682
    %v716 = vmax.f32 %v636, %v684
    %v733 = vlaneseq
    %v734 = vshrl.u32 %v733, 7
    %v735 = vsub.s32 0, %v734
    %v736 = vrot.slane %v701, %v735
    %v737 = vlaneseq
    %v738 = vshrl.u32 %v737, 7
    %v739 = vsub.s32 0, %v738
    %v740 = vrot.slane %v702, %v739
    %v741 = vlaneseq
    %v742 = vshrl.u32 %v741, 7
    %v743 = vsub.s32 0, %v742
    %v744 = vrot.slane %v703, %v743
    %v745 = vlaneseq
    %v746 = vshrl.u32 %v745, 7
    %v747 = vsub.s32 0, %v746
    %v748 = vrot.slane %v704, %v747
    %v749 = vlaneseq
    %v750 = vshrl.u32 %v749, 7
    %v751 = vsub.s32 0, %v750
    %v752 = vrot.slane %v705, %v751
    %v753 = vlaneseq
    %v754 = vshrl.u32 %v753, 7
    %v755 = vsub.s32 0, %v754
    %v756 = vrot.slane %v706, %v755
    %v757 = vlaneseq
    %v758 = vshrl.u32 %v757, 7
    %v759 = vsub.s32 0, %v758
    %v760 = vrot.slane %v707, %v759
    %v761 = vlaneseq
    %v762 = vshrl.u32 %v761, 7
    %v763 = vsub.s32 0, %v762
    %v764 = vrot.slane %v708, %v763
    %v765 = vlaneseq
    %v766 = vshrl.u32 %v765, 7
    %v767 = vsub.s32 0, %v766
    %v768 = vrot.slane %v709, %v767
    %v769 = vlaneseq
    %v770 = vshrl.u32 %v769, 7
    %v771 = vsub.s32 0, %v770
    %v772 = vrot.slane %v710, %v771
    %v773 = vlaneseq
    %v774 = vshrl.u32 %v773, 7
    %v775 = vsub.s32 0, %v774
    %v776 = vrot.slane %v711, %v775
    %v777 = vlaneseq
    %v778 = vshrl.u32 %v777, 7
    %v779 = vsub.s32 0, %v778
    %v780 = vrot.slane %v712, %v779
    %v781 = vlaneseq
    %v782 = vshrl.u32 %v781, 7
    %v783 = vsub.s32 0, %v782
    %v784 = vrot.slane %v713, %v783
    %v785 = vlaneseq
    %v786 = vshrl.u32 %v785, 7
    %v787 = vsub.s32 0, %v786
    %v788 = vrot.slane %v714, %v787
    %v789 = vlaneseq
    %v790 = vshrl.u32 %v789, 7
    %v791 = vsub.s32 0, %v790
    %v792 = vrot.slane %v715, %v791
    %v793 = vlaneseq
    %v794 = vshrl.u32 %v793, 7
    %v795 = vsub.s32 0, %v794
    %v796 = vrot.slane %v716, %v795
    %vm797 = vcmask 1041409
    %v798 = vsel %vm797, %v740, %v736
    %vm799 = vcmask 1042434
    %v800 = vsel %vm799, %v744, %v798
    %vm801 = vcmask 1043459
    %v802 = vsel %vm801, %v748, %v800
    %vm803 = vcmask 1044484
    %v804 = vsel %vm803, %v752, %v802
    %vm805 = vcmask 1045509
    %v806 = vsel %vm805, %v756, %v804
    %vm807 = vcmask 1046534
    %v808 = vsel %vm807, %v760, %v806
    %vm809 = vcmask 1047559
    %v810 = vsel %vm809, %v764, %v808
    %v811 = vsel %vm797, %v772, %v768
    %v812 = vsel %vm799, %v776, %v811
    %v813 = vsel %vm801, %v780, %v812
    %v814 = vsel %vm803, %v784, %v813
    %v815 = vsel %vm805, %v788, %v814
    %v816 = vsel %vm807, %v792, %v815
    %v817 = vsel %vm809, %v796, %v816
    %818 = vrot.lane.b32.xlu0 %v810, 4
    %v819 = vpop.permute.xlu0 %818
    %820 = vrot.lane.b32.xlu0 %v817, 4
    %v821 = vpop.permute.xlu0 %820
    %vm824 = vcmask 293920
    %825 = vst.msk [vmem:[#allocation3 + $0x1] sm:$0xff] %vm824, %v819
    %826 = vst.msk [vmem:[#allocation3 + $0x11] sm:$0xff] %vm824, %v821
    %vm827 = vcmask 319488
    %828 = vst.msk [vmem:[#allocation3] sm:$0x1] %vm827, 0.0
    %829 = vst.msk [vmem:[#allocation3 + $0x10] sm:$0x1] %vm827, 0.0
    %830 = vst.msk [vmem:[#allocation3 + $0x9] sm:$0x1] %vm827, 0.0
    %831 = vst.msk [vmem:[#allocation3 + $0x19] sm:$0x1] %vm827, 0.0
    %vm832 = vcmask 31744
    %833 = vst.msk [vmem:[#allocation3 + $0x1] sm:$0xff] %vm832, 0.0
    %834 = vst.msk [vmem:[#allocation3 + $0x11] sm:$0xff] %vm832, 0.0
    %vm835 = vcmask 326944
    %836 = vst.msk [vmem:[#allocation3 + $0x1] sm:$0xff] %vm835, 0.0
    %837 = vst.msk [vmem:[#allocation3 + $0x11] sm:$0xff] %vm835, 0.0
    %v838 = vld [vmem:[#allocation3] sm:$0xff]
    %v839 = vld [vmem:[#allocation3 + $0x10] sm:$0xff]
    %v840 = vld [vmem:[#allocation9] sm:$0xff]
    %v841 = vld [vmem:[#allocation9 + $0x8] sm:$0xff]
    %v842 = vld [vmem:[#allocation9 + $0x10] sm:$0xff]
    %v843 = vld [vmem:[#allocation9 + $0x18] sm:$0xff]
    %v844 = vld [vmem:[#allocation9 + $0x20] sm:$0xff]
    %v845 = vld [vmem:[#allocation3 + $0x1] sm:$0xff]
    %v846 = vld [vmem:[#allocation3 + $0x11] sm:$0xff]
    %s847 = scalar_lea.vmem [#allocation9], 40
    %v848 = vld [vmem:[%s847] sm:$0xff]
    %v849 = vld [vmem:[%s847 + $0x8] sm:$0xff]
    %v850 = vld [vmem:[%s847 + $0x10] sm:$0xff]
    %v851 = vld [vmem:[%s847 + $0x18] sm:$0xff]
    %v852 = vld [vmem:[%s847 + $0x20] sm:$0xff]
    %vm853 = vcmask 326656
    %v855 = vsel %vm853, %v845, 0
    %v858 = vsel %vm853, %v846, 0
    %860 = vmatprep.subr.mxu0 0.0
    %861 = vmatpush1.msra.mxu0 %v848
    %862 = vmatprep.subr.mxu0 0.0
    %863 = vmatpush1.msra.mxu0 %v849
    %864 = vmatprep.subr.mxu0 0.0
    %865 = vmatpush1.msra.mxu0 %v850
    %866 = vmatprep.subr.mxu0 0.0
    %867 = vmatpush1.msra.mxu0 %v851
    %868 = vmatprep.subr.mxu0 0.0
    %869 = vmatpush1.msra.mxu0 %v852
    %870 = vmatprep.subr.mxu0 0.0
    %871 = vmatpush1.msra.mxu0 0.0
    %872 = vmatprep.subr.mxu0 0.0
    %873 = vmatpush1.msra.mxu0 0.0
    %874 = vmatprep.subr.mxu0 0.0
    %875 = vmatpush1.msra.mxu0 0.0
    %876 = vmatprep.subr.mxu0 0.0
    %877 = vmatpush1.msra.mxu0 0.0
    %878 = vmatprep.subr.mxu0 0.0
    %879 = vmatpush1.msra.mxu0 0.0
    %880 = vmatprep.subr.mxu0 0.0
    %881 = vmatpush1.msra.mxu0 0.0
    %882 = vmatprep.subr.mxu0 0.0
    %883 = vmatpush1.msra.mxu0 0.0
    %884 = vmatprep.subr.mxu0 0.0
    %885 = vmatpush1.msra.mxu0 0.0
    %886 = vmatprep.subr.mxu0 0.0
    %887 = vmatpush1.msra.mxu0 0.0
    %888 = vmatprep.subr.mxu0 0.0
    %889 = vmatpush1.msra.mxu0 0.0
    %890 = vmatprep.subr.mxu0 0.0
    %891 = vmatpush1.msra.mxu0 0.0
    %892 = vmatprep.subr.mxu0 0.0
    %893 = vmatpush1.msra.mxu0 0.0
    %894 = vmatprep.subr.mxu0 0.0
    %895 = vmatpush1.msra.mxu0 0.0
    %896 = vmatprep.subr.mxu0 0.0
    %897 = vmatpush1.msra.mxu0 0.0
    %898 = vmatprep.subr.mxu0 0.0
    %899 = vmatpush1.msra.mxu0 0.0
    %900 = vmatprep.subr.mxu0 0.0
    %901 = vmatpush1.msra.mxu0 0.0
    %902 = vmatprep.subr.mxu0 0.0
    %903 = vmatpush1.msra.mxu0 0.0
    %904 = vmatprep.subr.mxu0 0.0
    %905 = vmatpush1.msra.mxu0 0.0
    %906 = vmatprep.subr.mxu0 0.0
    %907 = vmatpush1.msra.mxu0 0.0
    %908 = vmatprep.subr.mxu0 0.0
    %909 = vmatpush1.msra.mxu0 0.0
    %910 = vmatprep.subr.mxu0 0.0
    %911 = vmatpush1.msra.mxu0 0.0
    %912 = vmatprep.subr.mxu0 0.0
    %913 = vmatpush1.msra.mxu0 0.0
    %914 = vmatprep.subr.mxu0 0.0
    %915 = vmatpush1.msra.mxu0 0.0
    %916 = vmatprep.subr.mxu0 0.0
    %917 = vmatpush1.msra.mxu0 0.0
    %918 = vmatprep.subr.mxu0 0.0
    %919 = vmatpush1.msra.mxu0 0.0
    %920 = vmatprep.subr.mxu0 0.0
    %921 = vmatpush1.msra.mxu0 0.0
    %922 = vmatprep.subr.mxu0 0.0
    %923 = vmatpush1.msra.mxu0 0.0
    %924 = vmatprep.mubr.f32.mxu0 0.0
    %925 = vmatmul.mubr.f32.gmra.mrb[0].mxu0 %v855
    %v926 = vpop.f32.mrb[0].mxu0
    %v927 = vadd.f32 0.0, %v926
    %v928 = vpop.f32.mrb[0].mxu0
    %929 = vmatprep.mubr.f32.mxu0 0.0
    %930 = vmatmul.mubr.f32.gmra.mrb[0].mxu0 %v858
    %v931 = vpop.f32.mrb[0].mxu0
    %v932 = vadd.f32 0.0, %v931
    %v933 = vpop.f32.mrb[0].mxu0
    %934 = vdwg.mxu0
    %v936 = vsel %vm853, %v838, 0
    %v939 = vsel %vm853, %v839, 0
    %941 = vmatprep.subr.mxu0 0.0
    %942 = vmatpush1.msra.mxu0 %v840
    %943 = vmatprep.subr.mxu0 0.0
    %944 = vmatpush1.msra.mxu0 %v841
    %945 = vmatprep.subr.mxu0 0.0
    %946 = vmatpush1.msra.mxu0 %v842
    %947 = vmatprep.subr.mxu0 0.0
    %948 = vmatpush1.msra.mxu0 %v843
    %949 = vmatprep.subr.mxu0 0.0
    %950 = vmatpush1.msra.mxu0 %v844
    %951 = vmatprep.subr.mxu0 0.0
    %952 = vmatpush1.msra.mxu0 0.0
    %953 = vmatprep.subr.mxu0 0.0
    %954 = vmatpush1.msra.mxu0 0.0
    %955 = vmatprep.subr.mxu0 0.0
    %956 = vmatpush1.msra.mxu0 0.0
    %957 = vmatprep.subr.mxu0 0.0
    %958 = vmatpush1.msra.mxu0 0.0
    %959 = vmatprep.subr.mxu0 0.0
    %960 = vmatpush1.msra.mxu0 0.0
    %961 = vmatprep.subr.mxu0 0.0
    %962 = vmatpush1.msra.mxu0 0.0
    %963 = vmatprep.subr.mxu0 0.0
    %964 = vmatpush1.msra.mxu0 0.0
    %965 = vmatprep.subr.mxu0 0.0
    %966 = vmatpush1.msra.mxu0 0.0
    %967 = vmatprep.subr.mxu0 0.0
    %968 = vmatpush1.msra.mxu0 0.0
    %969 = vmatprep.subr.mxu0 0.0
    %970 = vmatpush1.msra.mxu0 0.0
    %971 = vmatprep.subr.mxu0 0.0
    %972 = vmatpush1.msra.mxu0 0.0
    %973 = vmatprep.subr.mxu0 0.0
    %974 = vmatpush1.msra.mxu0 0.0
    %975 = vmatprep.subr.mxu0 0.0
    %976 = vmatpush1.msra.mxu0 0.0
    %977 = vmatprep.subr.mxu0 0.0
    %978 = vmatpush1.msra.mxu0 0.0
    %979 = vmatprep.subr.mxu0 0.0
    %980 = vmatpush1.msra.mxu0 0.0
    %981 = vmatprep.subr.mxu0 0.0
    %982 = vmatpush1.msra.mxu0 0.0
    %983 = vmatprep.subr.mxu0 0.0
    %984 = vmatpush1.msra.mxu0 0.0
    %985 = vmatprep.subr.mxu0 0.0
    %986 = vmatpush1.msra.mxu0 0.0
    %987 = vmatprep.subr.mxu0 0.0
    %988 = vmatpush1.msra.mxu0 0.0
    %989 = vmatprep.subr.mxu0 0.0
    %990 = vmatpush1.msra.mxu0 0.0
    %991 = vmatprep.subr.mxu0 0.0
    %992 = vmatpush1.msra.mxu0 0.0
    %993 = vmatprep.subr.mxu0 0.0
    %994 = vmatpush1.msra.mxu0 0.0
    %995 = vmatprep.subr.mxu0 0.0
    %996 = vmatpush1.msra.mxu0 0.0
    %997 = vmatprep.subr.mxu0 0.0
    %998 = vmatpush1.msra.mxu0 0.0
    %999 = vmatprep.subr.mxu0 0.0
    %1000 = vmatpush1.msra.mxu0 0.0
    %1001 = vmatprep.subr.mxu0 0.0
    %1002 = vmatpush1.msra.mxu0 0.0
    %1003 = vmatprep.subr.mxu0 0.0
    %1004 = vmatpush1.msra.mxu0 0.0
    %1005 = vmatprep.mubr.f32.mxu0 0.0
    %1006 = vmatmul.mubr.f32.gmra.mrb[0].mxu0 %v936
    %v1007 = vpop.f32.mrb[0].mxu0
    %v1008 = vadd.f32 %v927, %v1007
    %v1009 = vpop.f32.mrb[0].mxu0
    %1010 = vmatprep.mubr.f32.mxu0 0.0
    %1011 = vmatmul.mubr.f32.gmra.mrb[0].mxu0 %v939
    %v1012 = vpop.f32.mrb[0].mxu0
    %v1013 = vadd.f32 %v932, %v1012
    %v1014 = vpop.f32.mrb[0].mxu0
    %1015 = vdwg.mxu0
    %v1016 = vld [vmem:[#allocation3 + $0x2] sm:$0xff]
    %v1017 = vld [vmem:[#allocation3 + $0x12] sm:$0xff]
    %s1018 = scalar_lea.vmem [#allocation9], 80
    %v1019 = vld [vmem:[%s1018] sm:$0xff]
    %v1020 = vld [vmem:[%s1018 + $0x8] sm:$0xff]
    %v1021 = vld [vmem:[%s1018 + $0x10] sm:$0xff]
    %v1022 = vld [vmem:[%s1018 + $0x18] sm:$0xff]
    %v1023 = vld [vmem:[%s1018 + $0x20] sm:$0xff]
    %v1025 = vsel %vm853, %v1016, 0
    %v1028 = vsel %vm853, %v1017, 0
    %1030 = vmatprep.subr.mxu0 0.0
    %1031 = vmatpush1.msra.mxu0 %v1019
    %1032 = vmatprep.subr.mxu0 0.0
    %1033 = vmatpush1.msra.mxu0 %v1020
    %1034 = vmatprep.subr.mxu0 0.0
    %1035 = vmatpush1.msra.mxu0 %v1021
    %1036 = vmatprep.subr.mxu0 0.0
    %1037 = vmatpush1.msra.mxu0 %v1022
    %1038 = vmatprep.subr.mxu0 0.0
    %1039 = vmatpush1.msra.mxu0 %v1023
    %1040 = vmatprep.subr.mxu0 0.0
    %1041 = vmatpush1.msra.mxu0 0.0
    %1042 = vmatprep.subr.mxu0 0.0
    %1043 = vmatpush1.msra.mxu0 0.0
    %1044 = vmatprep.subr.mxu0 0.0
    %1045 = vmatpush1.msra.mxu0 0.0
    %1046 = vmatprep.subr.mxu0 0.0
    %1047 = vmatpush1.msra.mxu0 0.0
    %1048 = vmatprep.subr.mxu0 0.0
    %1049 = vmatpush1.msra.mxu0 0.0
    %1050 = vmatprep.subr.mxu0 0.0
    %1051 = vmatpush1.msra.mxu0 0.0
    %1052 = vmatprep.subr.mxu0 0.0
    %1053 = vmatpush1.msra.mxu0 0.0
    %1054 = vmatprep.subr.mxu0 0.0
    %1055 = vmatpush1.msra.mxu0 0.0
    %1056 = vmatprep.subr.mxu0 0.0
    %1057 = vmatpush1.msra.mxu0 0.0
    %1058 = vmatprep.subr.mxu0 0.0
    %1059 = vmatpush1.msra.mxu0 0.0
    %1060 = vmatprep.subr.mxu0 0.0
    %1061 = vmatpush1.msra.mxu0 0.0
    %1062 = vmatprep.subr.mxu0 0.0
    %1063 = vmatpush1.msra.mxu0 0.0
    %1064 = vmatprep.subr.mxu0 0.0
    %1065 = vmatpush1.msra.mxu0 0.0
    %1066 = vmatprep.subr.mxu0 0.0
    %1067 = vmatpush1.msra.mxu0 0.0
    %1068 = vmatprep.subr.mxu0 0.0
    %1069 = vmatpush1.msra.mxu0 0.0
    %1070 = vmatprep.subr.mxu0 0.0
    %1071 = vmatpush1.msra.mxu0 0.0
    %1072 = vmatprep.subr.mxu0 0.0
    %1073 = vmatpush1.msra.mxu0 0.0
    %1074 = vmatprep.subr.mxu0 0.0
    %1075 = vmatpush1.msra.mxu0 0.0
    %1076 = vmatprep.subr.mxu0 0.0
    %1077 = vmatpush1.msra.mxu0 0.0
    %1078 = vmatprep.subr.mxu0 0.0
    %1079 = vmatpush1.msra.mxu0 0.0
    %1080 = vmatprep.subr.mxu0 0.0
    %1081 = vmatpush1.msra.mxu0 0.0
    %1082 = vmatprep.subr.mxu0 0.0
    %1083 = vmatpush1.msra.mxu0 0.0
    %1084 = vmatprep.subr.mxu0 0.0
    %1085 = vmatpush1.msra.mxu0 0.0
    %1086 = vmatprep.subr.mxu0 0.0
    %1087 = vmatpush1.msra.mxu0 0.0
    %1088 = vmatprep.subr.mxu0 0.0
    %1089 = vmatpush1.msra.mxu0 0.0
    %1090 = vmatprep.subr.mxu0 0.0
    %1091 = vmatpush1.msra.mxu0 0.0
    %1092 = vmatprep.subr.mxu0 0.0
    %1093 = vmatpush1.msra.mxu0 0.0
    %1094 = vmatprep.mubr.f32.mxu0 0.0
    %1095 = vmatmul.mubr.f32.gmra.mrb[0].mxu0 %v1025
    %v1096 = vpop.f32.mrb[0].mxu0
    %v1097 = vadd.f32 0.0, %v1096
    %v1098 = vpop.f32.mrb[0].mxu0
    %1099 = vmatprep.mubr.f32.mxu0 0.0
    %1100 = vmatmul.mubr.f32.gmra.mrb[0].mxu0 %v1028
    %v1101 = vpop.f32.mrb[0].mxu0
    %v1102 = vadd.f32 0.0, %v1101
    %v1103 = vpop.f32.mrb[0].mxu0
    %1104 = vdwg.mxu0
    %v1105 = vadd.f32 %v1008, %v1097
    %v1106 = vadd.f32 %v1013, %v1102
    %v1107 = vld [vmem:[%s4] sm:$0x1]
    %v1109 = vlaneseq
    %v1110 = vshrl.u32 %v1109, 7
    %v1111 = vsub.s32 0, %v1110
    %v1112 = vrot.slane %v1107, %v1111
    %v1114 = vadd.f32 %v1105, %v1112
    %v1115 = vadd.f32 %v1106, %v1112
    %v1116 = vmax.f32 %v1114, 0.0
    %v1117 = vmax.f32 %v1115, 0.0
    %v1120 = vcombine.high %v1116, %v1116
    %v1122 = vunpack.c.l.s4 1983009808
    %v1123 = vunpack.c.0.s8 %v1122
    %v1124 = vlaneseq
    %v1125 = vshrl.u32 %v1124, 7
    %v1126 = vsub.s32 %v1123, %v1125
    %v1127 = vrot.slane %v1116, %v1126
    %v1129 = vunpack.c.l.s4 1983009808
    %v1130 = vunpack.c.0.s8 %v1129
    %v1131 = vlaneseq
    %v1132 = vshrl.u32 %v1131, 7
    %v1133 = vsub.s32 %v1130, %v1132
    %v1134 = vrot.slane %v1120, %v1133
    %v1135 = vcombine.high %v1127, %v1127
    %v1136 = vcombine.high %v1134, %v1134
    %v1137 = vcombine.high %v1117, %v1117
    %v1139 = vunpack.c.l.s4 1983009808
    %v1140 = vunpack.c.0.s8 %v1139
    %v1141 = vlaneseq
    %v1142 = vshrl.u32 %v1141, 7
    %v1143 = vsub.s32 %v1140, %v1142
    %v1144 = vrot.slane %v1117, %v1143
    %v1146 = vunpack.c.l.s4 1983009808
    %v1147 = vunpack.c.0.s8 %v1146
    %v1148 = vlaneseq
    %v1149 = vshrl.u32 %v1148, 7
    %v1150 = vsub.s32 %v1147, %v1149
    %v1151 = vrot.slane %v1137, %v1150
    %v1152 = vcombine.high %v1144, %v1144
    %v1153 = vcombine.high %v1151, %v1151
    %v1162 = vrot.slane %v1127, 7
    %v1163 = vrot.slane %v1162, 2
    %v1164 = vrot.slane %v1135, 7
    %v1165 = vrot.slane %v1164, 2
    %v1166 = vrot.slane %v1134, 7
    %v1167 = vrot.slane %v1166, 2
    %v1168 = vrot.slane %v1136, 7
    %v1169 = vrot.slane %v1168, 2
    %v1170 = vrot.slane %v1144, 7
    %v1171 = vrot.slane %v1170, 2
    %v1172 = vrot.slane %v1152, 7
    %v1173 = vrot.slane %v1172, 2
    %v1174 = vrot.slane %v1151, 7
    %v1175 = vrot.slane %v1174, 2
    %v1176 = vrot.slane %v1153, 7
    %v1177 = vrot.slane %v1176, 2
    %v1186 = vmax.f32 %v1127, %v1163
    %v1187 = vmax.f32 %v1135, %v1165
    %v1188 = vmax.f32 %v1134, %v1167
    %v1189 = vmax.f32 %v1136, %v1169
    %v1190 = vmax.f32 %v1144, %v1171
    %v1191 = vmax.f32 %v1152, %v1173
    %v1192 = vmax.f32 %v1151, %v1175
    %v1193 = vmax.f32 %v1153, %v1177
    %1202 = vrot.lane.b32.xlu0 %v1186, 96
    %v1203 = vpop.permute.xlu0 %1202
    %1204 = vrot.lane.b32.xlu0 %v1187, 96
    %v1205 = vpop.permute.xlu0 %1204
    %1206 = vrot.lane.b32.xlu0 %v1188, 96
    %v1207 = vpop.permute.xlu0 %1206
    %1208 = vrot.lane.b32.xlu0 %v1189, 96
    %v1209 = vpop.permute.xlu0 %1208
    %1210 = vrot.lane.b32.xlu0 %v1190, 96
    %v1211 = vpop.permute.xlu0 %1210
    %1212 = vrot.lane.b32.xlu0 %v1191, 96
    %v1213 = vpop.permute.xlu0 %1212
    %1214 = vrot.lane.b32.xlu0 %v1192, 96
    %v1215 = vpop.permute.xlu0 %1214
    %1216 = vrot.lane.b32.xlu0 %v1193, 96
    %v1217 = vpop.permute.xlu0 %1216
    %v1226 = vmax.f32 %v1186, %v1203
    %v1227 = vmax.f32 %v1187, %v1205
    %v1228 = vmax.f32 %v1188, %v1207
    %v1229 = vmax.f32 %v1189, %v1209
    %v1230 = vmax.f32 %v1190, %v1211
    %v1231 = vmax.f32 %v1191, %v1213
    %v1232 = vmax.f32 %v1192, %v1215
    %v1233 = vmax.f32 %v1193, %v1217
    %v1234 = vld [vmem:[#allocation10] sm:$0xff]
    %v1235 = vld [vmem:[#allocation10 + $0x8] sm:$0xff]
    %v1236 = vld [vmem:[#allocation10 + $0x10] sm:$0xff]
    %v1237 = vld [vmem:[#allocation10 + $0x18] sm:$0xff]
    %v1238 = vld [vmem:[#allocation10 + $0x20] sm:$0xff]
    %v1239 = vld [vmem:[#allocation10 + $0x28] sm:$0xff]
    %v1240 = vld [vmem:[#allocation10 + $0x30] sm:$0xff]
    %v1241 = vld [vmem:[#allocation10 + $0x38] sm:$0xff]
    %v1244 = vlaneseq
    %v1245 = vshrl.u32 %v1244, 7
    %v1246 = vsub.s32 0, %v1245
    %v1247 = vrot.slane %v1227, %v1246
    %v1248 = vlaneseq
    %v1249 = vshrl.u32 %v1248, 7
    %v1250 = vsub.s32 0, %v1249
    %v1251 = vrot.slane %v1231, %v1250
    %v1252 = vsel %vm797, %v1251, %v1247
    %vm1253 = vcmask 261120
    %v1254 = vsel %vm1253, %v1252, 0
    %1256 = vmatprep.subr.mxu0 0.0
    %1257 = vmatpush1.msra.mxu0 %v1238
    %1258 = vmatprep.subr.mxu0 0.0
    %1259 = vmatpush1.msra.mxu0 %v1239
    %1260 = vmatprep.subr.mxu0 0.0
    %1261 = vmatpush1.msra.mxu0 %v1240
    %1262 = vmatprep.subr.mxu0 0.0
    %1263 = vmatpush1.msra.mxu0 %v1241
    %1264 = vmatprep.subr.mxu0 0.0
    %1265 = vmatpush1.msra.mxu0 0.0
    %1266 = vmatprep.subr.mxu0 0.0
    %1267 = vmatpush1.msra.mxu0 0.0
    %1268 = vmatprep.subr.mxu0 0.0
    %1269 = vmatpush1.msra.mxu0 0.0
    %1270 = vmatprep.subr.mxu0 0.0
    %1271 = vmatpush1.msra.mxu0 0.0
    %1272 = vmatprep.subr.mxu0 0.0
    %1273 = vmatpush1.msra.mxu0 0.0
    %1274 = vmatprep.subr.mxu0 0.0
    %1275 = vmatpush1.msra.mxu0 0.0
    %1276 = vmatprep.subr.mxu0 0.0
    %1277 = vmatpush1.msra.mxu0 0.0
    %1278 = vmatprep.subr.mxu0 0.0
    %1279 = vmatpush1.msra.mxu0 0.0
    %1280 = vmatprep.subr.mxu0 0.0
    %1281 = vmatpush1.msra.mxu0 0.0
    %1282 = vmatprep.subr.mxu0 0.0
    %1283 = vmatpush1.msra.mxu0 0.0
    %1284 = vmatprep.subr.mxu0 0.0
    %1285 = vmatpush1.msra.mxu0 0.0
    %1286 = vmatprep.subr.mxu0 0.0
    %1287 = vmatpush1.msra.mxu0 0.0
    %1288 = vmatprep.subr.mxu0 0.0
    %1289 = vmatpush1.msra.mxu0 0.0
    %1290 = vmatprep.subr.mxu0 0.0
    %1291 = vmatpush1.msra.mxu0 0.0
    %1292 = vmatprep.subr.mxu0 0.0
    %1293 = vmatpush1.msra.mxu0 0.0
    %1294 = vmatprep.subr.mxu0 0.0
    %1295 = vmatpush1.msra.mxu0 0.0
    %1296 = vmatprep.subr.mxu0 0.0
    %1297 = vmatpush1.msra.mxu0 0.0
    %1298 = vmatprep.subr.mxu0 0.0
    %1299 = vmatpush1.msra.mxu0 0.0
    %1300 = vmatprep.subr.mxu0 0.0
    %1301 = vmatpush1.msra.mxu0 0.0
    %1302 = vmatprep.subr.mxu0 0.0
    %1303 = vmatpush1.msra.mxu0 0.0
    %1304 = vmatprep.subr.mxu0 0.0
    %1305 = vmatpush1.msra.mxu0 0.0
    %1306 = vmatprep.subr.mxu0 0.0
    %1307 = vmatpush1.msra.mxu0 0.0
    %1308 = vmatprep.subr.mxu0 0.0
    %1309 = vmatpush1.msra.mxu0 0.0
    %1310 = vmatprep.subr.mxu0 0.0
    %1311 = vmatpush1.msra.mxu0 0.0
    %1312 = vmatprep.subr.mxu0 0.0
    %1313 = vmatpush1.msra.mxu0 0.0
    %1314 = vmatprep.subr.mxu0 0.0
    %1315 = vmatpush1.msra.mxu0 0.0
    %1316 = vmatprep.subr.mxu0 0.0
    %1317 = vmatpush1.msra.mxu0 0.0
    %1318 = vmatprep.subr.mxu0 0.0
    %1319 = vmatpush1.msra.mxu0 0.0
    %1320 = vmatprep.mubr.f32.mxu0 0.0
    %1321 = vmatmul.mubr.f32.gmra.mrb[0].mxu0 %v1254
    %v1322 = vpop.f32.mrb[0].mxu0
    %v1323 = vadd.f32 0.0, %v1322
    %v1324 = vpop.f32.mrb[0].mxu0
    %1325 = vdwg.mxu0
    %v1328 = vlaneseq
    %v1329 = vshrl.u32 %v1328, 7
    %v1330 = vsub.s32 0, %v1329
    %v1331 = vrot.slane %v1226, %v1330
    %v1332 = vlaneseq
    %v1333 = vshrl.u32 %v1332, 7
    %v1334 = vsub.s32 0, %v1333
    %v1335 = vrot.slane %v1230, %v1334
    %v1336 = vsel %vm797, %v1335, %v1331
    %v1337 = vsel %vm1253, %v1336, 0
    %1339 = vmatprep.subr.mxu0 0.0
    %1340 = vmatpush1.msra.mxu0 %v1234
    %1341 = vmatprep.subr.mxu0 0.0
    %1342 = vmatpush1.msra.mxu0 %v1235
    %1343 = vmatprep.subr.mxu0 0.0
    %1344 = vmatpush1.msra.mxu0 %v1236
    %1345 = vmatprep.subr.mxu0 0.0
    %1346 = vmatpush1.msra.mxu0 %v1237
    %1347 = vmatprep.subr.mxu0 0.0
    %1348 = vmatpush1.msra.mxu0 0.0
    %1349 = vmatprep.subr.mxu0 0.0
    %1350 = vmatpush1.msra.mxu0 0.0
    %1351 = vmatprep.subr.mxu0 0.0
    %1352 = vmatpush1.msra.mxu0 0.0
    %1353 = vmatprep.subr.mxu0 0.0
    %1354 = vmatpush1.msra.mxu0 0.0
    %1355 = vmatprep.subr.mxu0 0.0
    %1356 = vmatpush1.msra.mxu0 0.0
    %1357 = vmatprep.subr.mxu0 0.0
    %1358 = vmatpush1.msra.mxu0 0.0
    %1359 = vmatprep.subr.mxu0 0.0
    %1360 = vmatpush1.msra.mxu0 0.0
    %1361 = vmatprep.subr.mxu0 0.0
    %1362 = vmatpush1.msra.mxu0 0.0
    %1363 = vmatprep.subr.mxu0 0.0
    %1364 = vmatpush1.msra.mxu0 0.0
    %1365 = vmatprep.subr.mxu0 0.0
    %1366 = vmatpush1.msra.mxu0 0.0
    %1367 = vmatprep.subr.mxu0 0.0
    %1368 = vmatpush1.msra.mxu0 0.0
    %1369 = vmatprep.subr.mxu0 0.0
    %1370 = vmatpush1.msra.mxu0 0.0
    %1371 = vmatprep.subr.mxu0 0.0
    %1372 = vmatpush1.msra.mxu0 0.0
    %1373 = vmatprep.subr.mxu0 0.0
    %1374 = vmatpush1.msra.mxu0 0.0
    %1375 = vmatprep.subr.mxu0 0.0
    %1376 = vmatpush1.msra.mxu0 0.0
    %1377 = vmatprep.subr.mxu0 0.0
    %1378 = vmatpush1.msra.mxu0 0.0
    %1379 = vmatprep.subr.mxu0 0.0
    %1380 = vmatpush1.msra.mxu0 0.0
    %1381 = vmatprep.subr.mxu0 0.0
    %1382 = vmatpush1.msra.mxu0 0.0
    %1383 = vmatprep.subr.mxu0 0.0
    %1384 = vmatpush1.msra.mxu0 0.0
    %1385 = vmatprep.subr.mxu0 0.0
    %1386 = vmatpush1.msra.mxu0 0.0
    %1387 = vmatprep.subr.mxu0 0.0
    %1388 = vmatpush1.msra.mxu0 0.0
    %1389 = vmatprep.subr.mxu0 0.0
    %1390 = vmatpush1.msra.mxu0 0.0
    %1391 = vmatprep.subr.mxu0 0.0
    %1392 = vmatpush1.msra.mxu0 0.0
    %1393 = vmatprep.subr.mxu0 0.0
    %1394 = vmatpush1.msra.mxu0 0.0
    %1395 = vmatprep.subr.mxu0 0.0
    %1396 = vmatpush1.msra.mxu0 0.0
    %1397 = vmatprep.subr.mxu0 0.0
    %1398 = vmatpush1.msra.mxu0 0.0
    %1399 = vmatprep.subr.mxu0 0.0
    %1400 = vmatpush1.msra.mxu0 0.0
    %1401 = vmatprep.subr.mxu0 0.0
    %1402 = vmatpush1.msra.mxu0 0.0
    %1403 = vmatprep.mubr.f32.mxu0 0.0
    %1404 = vmatmul.mubr.f32.gmra.mrb[0].mxu0 %v1337
    %v1405 = vpop.f32.mrb[0].mxu0
    %v1406 = vadd.f32 %v1323, %v1405
    %v1407 = vpop.f32.mrb[0].mxu0
    %1408 = vdwg.mxu0
    %v1409 = vld [vmem:[#allocation10 + $0x40] sm:$0xff]
    %v1410 = vld [vmem:[#allocation10 + $0x48] sm:$0xff]
    %v1411 = vld [vmem:[#allocation10 + $0x50] sm:$0xff]
    %v1412 = vld [vmem:[#allocation10 + $0x58] sm:$0xff]
    %v1415 = vlaneseq
    %v1416 = vshrl.u32 %v1415, 7
    %v1417 = vsub.s32 0, %v1416
    %v1418 = vrot.slane %v1228, %v1417
    %v1419 = vlaneseq
    %v1420 = vshrl.u32 %v1419, 7
    %v1421 = vsub.s32 0, %v1420
    %v1422 = vrot.slane %v1232, %v1421
    %v1423 = vsel %vm797, %v1422, %v1418
    %v1424 = vsel %vm1253, %v1423, 0
    %1426 = vmatprep.subr.mxu0 0.0
    %1427 = vmatpush1.msra.mxu0 %v1409
    %1428 = vmatprep.subr.mxu0 0.0
    %1429 = vmatpush1.msra.mxu0 %v1410
    %1430 = vmatprep.subr.mxu0 0.0
    %1431 = vmatpush1.msra.mxu0 %v1411
    %1432 = vmatprep.subr.mxu0 0.0
    %1433 = vmatpush1.msra.mxu0 %v1412
    %1434 = vmatprep.subr.mxu0 0.0
    %1435 = vmatpush1.msra.mxu0 0.0
    %1436 = vmatprep.subr.mxu0 0.0
    %1437 = vmatpush1.msra.mxu0 0.0
    %1438 = vmatprep.subr.mxu0 0.0
    %1439 = vmatpush1.msra.mxu0 0.0
    %1440 = vmatprep.subr.mxu0 0.0
    %1441 = vmatpush1.msra.mxu0 0.0
    %1442 = vmatprep.subr.mxu0 0.0
    %1443 = vmatpush1.msra.mxu0 0.0
    %1444 = vmatprep.subr.mxu0 0.0
    %1445 = vmatpush1.msra.mxu0 0.0
    %1446 = vmatprep.subr.mxu0 0.0
    %1447 = vmatpush1.msra.mxu0 0.0
    %1448 = vmatprep.subr.mxu0 0.0
    %1449 = vmatpush1.msra.mxu0 0.0
    %1450 = vmatprep.subr.mxu0 0.0
    %1451 = vmatpush1.msra.mxu0 0.0
    %1452 = vmatprep.subr.mxu0 0.0
    %1453 = vmatpush1.msra.mxu0 0.0
    %1454 = vmatprep.subr.mxu0 0.0
    %1455 = vmatpush1.msra.mxu0 0.0
    %1456 = vmatprep.subr.mxu0 0.0
    %1457 = vmatpush1.msra.mxu0 0.0
    %1458 = vmatprep.subr.mxu0 0.0
    %1459 = vmatpush1.msra.mxu0 0.0
    %1460 = vmatprep.subr.mxu0 0.0
    %1461 = vmatpush1.msra.mxu0 0.0
    %1462 = vmatprep.subr.mxu0 0.0
    %1463 = vmatpush1.msra.mxu0 0.0
    %1464 = vmatprep.subr.mxu0 0.0
    %1465 = vmatpush1.msra.mxu0 0.0
    %1466 = vmatprep.subr.mxu0 0.0
    %1467 = vmatpush1.msra.mxu0 0.0
    %1468 = vmatprep.subr.mxu0 0.0
    %1469 = vmatpush1.msra.mxu0 0.0
    %1470 = vmatprep.subr.mxu0 0.0
    %1471 = vmatpush1.msra.mxu0 0.0
    %1472 = vmatprep.subr.mxu0 0.0
    %1473 = vmatpush1.msra.mxu0 0.0
    %1474 = vmatprep.subr.mxu0 0.0
    %1475 = vmatpush1.msra.mxu0 0.0
    %1476 = vmatprep.subr.mxu0 0.0
    %1477 = vmatpush1.msra.mxu0 0.0
    %1478 = vmatprep.subr.mxu0 0.0
    %1479 = vmatpush1.msra.mxu0 0.0
    %1480 = vmatprep.subr.mxu0 0.0
    %1481 = vmatpush1.msra.mxu0 0.0
    %1482 = vmatprep.subr.mxu0 0.0
    %1483 = vmatpush1.msra.mxu0 0.0
    %1484 = vmatprep.subr.mxu0 0.0
    %1485 = vmatpush1.msra.mxu0 0.0
    %1486 = vmatprep.subr.mxu0 0.0
    %1487 = vmatpush1.msra.mxu0 0.0
    %1488 = vmatprep.subr.mxu0 0.0
    %1489 = vmatpush1.msra.mxu0 0.0
    %1490 = vmatprep.mubr.f32.mxu0 0.0
    %1491 = vmatmul.mubr.f32.gmra.mrb[0].mxu0 %v1424
    %v1492 = vpop.f32.mrb[0].mxu0
    %v1493 = vadd.f32 0.0, %v1492
    %v1494 = vpop.f32.mrb[0].mxu0
    %1495 = vdwg.mxu0
    %v1496 = vadd.f32 %v1406, %v1493
    %v1497 = vld [vmem:[#allocation10 + $0x60] sm:$0xff]
    %v1498 = vld [vmem:[#allocation10 + $0x68] sm:$0xff]
    %v1499 = vld [vmem:[#allocation10 + $0x70] sm:$0xff]
    %v1500 = vld [vmem:[#allocation10 + $0x78] sm:$0xff]
    %v1503 = vlaneseq
    %v1504 = vshrl.u32 %v1503, 7
    %v1505 = vsub.s32 0, %v1504
    %v1506 = vrot.slane %v1229, %v1505
    %v1507 = vlaneseq
    %v1508 = vshrl.u32 %v1507, 7
    %v1509 = vsub.s32 0, %v1508
    %v1510 = vrot.slane %v1233, %v1509
    %v1511 = vsel %vm797, %v1510, %v1506
    %v1512 = vsel %vm1253, %v1511, 0
    %1514 = vmatprep.subr.mxu0 0.0
    %1515 = vmatpush1.msra.mxu0 %v1497
    %1516 = vmatprep.subr.mxu0 0.0
    %1517 = vmatpush1.msra.mxu0 %v1498
    %1518 = vmatprep.subr.mxu0 0.0
    %1519 = vmatpush1.msra.mxu0 %v1499
    %1520 = vmatprep.subr.mxu0 0.0
    %1521 = vmatpush1.msra.mxu0 %v1500
    %1522 = vmatprep.subr.mxu0 0.0
    %1523 = vmatpush1.msra.mxu0 0.0
    %1524 = vmatprep.subr.mxu0 0.0
    %1525 = vmatpush1.msra.mxu0 0.0
    %1526 = vmatprep.subr.mxu0 0.0
    %1527 = vmatpush1.msra.mxu0 0.0
    %1528 = vmatprep.subr.mxu0 0.0
    %1529 = vmatpush1.msra.mxu0 0.0
    %1530 = vmatprep.subr.mxu0 0.0
    %1531 = vmatpush1.msra.mxu0 0.0
    %1532 = vmatprep.subr.mxu0 0.0
    %1533 = vmatpush1.msra.mxu0 0.0
    %1534 = vmatprep.subr.mxu0 0.0
    %1535 = vmatpush1.msra.mxu0 0.0
    %1536 = vmatprep.subr.mxu0 0.0
    %1537 = vmatpush1.msra.mxu0 0.0
    %1538 = vmatprep.subr.mxu0 0.0
    %1539 = vmatpush1.msra.mxu0 0.0
    %1540 = vmatprep.subr.mxu0 0.0
    %1541 = vmatpush1.msra.mxu0 0.0
    %1542 = vmatprep.subr.mxu0 0.0
    %1543 = vmatpush1.msra.mxu0 0.0
    %1544 = vmatprep.subr.mxu0 0.0
    %1545 = vmatpush1.msra.mxu0 0.0
    %1546 = vmatprep.subr.mxu0 0.0
    %1547 = vmatpush1.msra.mxu0 0.0
    %1548 = vmatprep.subr.mxu0 0.0
    %1549 = vmatpush1.msra.mxu0 0.0
    %1550 = vmatprep.subr.mxu0 0.0
    %1551 = vmatpush1.msra.mxu0 0.0
    %1552 = vmatprep.subr.mxu0 0.0
    %1553 = vmatpush1.msra.mxu0 0.0
    %1554 = vmatprep.subr.mxu0 0.0
    %1555 = vmatpush1.msra.mxu0 0.0
    %1556 = vmatprep.subr.mxu0 0.0
    %1557 = vmatpush1.msra.mxu0 0.0
    %1558 = vmatprep.subr.mxu0 0.0
    %1559 = vmatpush1.msra.mxu0 0.0
    %1560 = vmatprep.subr.mxu0 0.0
    %1561 = vmatpush1.msra.mxu0 0.0
    %1562 = vmatprep.subr.mxu0 0.0
    %1563 = vmatpush1.msra.mxu0 0.0
    %1564 = vmatprep.subr.mxu0 0.0
    %1565 = vmatpush1.msra.mxu0 0.0
    %1566 = vmatprep.subr.mxu0 0.0
    %1567 = vmatpush1.msra.mxu0 0.0
    %1568 = vmatprep.subr.mxu0 0.0
    %1569 = vmatpush1.msra.mxu0 0.0
    %1570 = vmatprep.subr.mxu0 0.0
    %1571 = vmatpush1.msra.mxu0 0.0
    %1572 = vmatprep.subr.mxu0 0.0
    %1573 = vmatpush1.msra.mxu0 0.0
    %1574 = vmatprep.subr.mxu0 0.0
    %1575 = vmatpush1.msra.mxu0 0.0
    %1576 = vmatprep.subr.mxu0 0.0
    %1577 = vmatpush1.msra.mxu0 0.0
    %1578 = vmatprep.mubr.f32.mxu0 0.0
    %1579 = vmatmul.mubr.f32.gmra.mrb[0].mxu0 %v1512
    %v1580 = vpop.f32.mrb[0].mxu0
    %v1581 = vadd.f32 0.0, %v1580
    %v1582 = vpop.f32.mrb[0].mxu0
    %1583 = vdwg.mxu0
    %v1584 = vadd.f32 %v1496, %v1581
    %v1585 = vld [vmem:[%s6] sm:$0x1]
    %v1587 = vlaneseq
    %v1588 = vshrl.u32 %v1587, 7
    %v1589 = vsub.s32 0, %v1588
    %v1590 = vrot.slane %v1585, %v1589
    %v1592 = vadd.f32 %v1584, %v1590
    %v1593 = vmax.f32 %v1592, 0.0
    %v1594 = vld [vmem:[#allocation12] sm:$0xff]
    %v1595 = vld [vmem:[#allocation12 + $0x8] sm:$0xff]
    %v1596 = vld [vmem:[#allocation12 + $0x10] sm:$0xff]
    %v1597 = vld [vmem:[#allocation12 + $0x18] sm:$0xff]
    %v1598 = vld [vmem:[#allocation12 + $0x20] sm:$0xff]
    %v1599 = vld [vmem:[#allocation12 + $0x28] sm:$0xff]
    %v1600 = vld [vmem:[#allocation12 + $0x30] sm:$0xff]
    %v1601 = vld [vmem:[#allocation12 + $0x38] sm:$0xff]
    %v1602 = vld [vmem:[#allocation12 + $0x40] sm:$0xff]
    %v1603 = vld [vmem:[#allocation12 + $0x48] sm:$0xff]
    %v1604 = vld [vmem:[#allocation12 + $0x50] sm:$0xff]
    %v1605 = vld [vmem:[#allocation12 + $0x58] sm:$0xff]
    %v1606 = vld [vmem:[#allocation12 + $0x60] sm:$0xff]
    %v1607 = vld [vmem:[#allocation12 + $0x68] sm:$0xff]
    %v1608 = vld [vmem:[#allocation12 + $0x70] sm:$0xff]
    %v1609 = vld [vmem:[#allocation12 + $0x78] sm:$0xff]
    %v1610 = vld [vmem:[%s8] sm:$0x1]
    %v1612 = vlaneseq
    %v1613 = vshrl.u32 %v1612, 7
    %v1614 = vsub.s32 0, %v1613
    %v1615 = vrot.slane %v1610, %v1614
    %1617 = vmatprep.subr.mxu0 0.0
    %1618 = vmatpush1.msra.mxu0 %v1594
    %1619 = vmatprep.subr.mxu0 0.0
    %1620 = vmatpush1.msra.mxu0 %v1595
    %1621 = vmatprep.subr.mxu0 0.0
    %1622 = vmatpush1.msra.mxu0 %v1596
    %1623 = vmatprep.subr.mxu0 0.0
    %1624 = vmatpush1.msra.mxu0 %v1597
    %1625 = vmatprep.subr.mxu0 0.0
    %1626 = vmatpush1.msra.mxu0 %v1598
    %1627 = vmatprep.subr.mxu0 0.0
    %1628 = vmatpush1.msra.mxu0 %v1599
    %1629 = vmatprep.subr.mxu0 0.0
    %1630 = vmatpush1.msra.mxu0 %v1600
    %1631 = vmatprep.subr.mxu0 0.0
    %1632 = vmatpush1.msra.mxu0 %v1601
    %1633 = vmatprep.subr.mxu0 0.0
    %1634 = vmatpush1.msra.mxu0 %v1602
    %1635 = vmatprep.subr.mxu0 0.0
    %1636 = vmatpush1.msra.mxu0 %v1603
    %1637 = vmatprep.subr.mxu0 0.0
    %1638 = vmatpush1.msra.mxu0 %v1604
    %1639 = vmatprep.subr.mxu0 0.0
    %1640 = vmatpush1.msra.mxu0 %v1605
    %1641 = vmatprep.subr.mxu0 0.0
    %1642 = vmatpush1.msra.mxu0 %v1606
    %1643 = vmatprep.subr.mxu0 0.0
    %1644 = vmatpush1.msra.mxu0 %v1607
    %1645 = vmatprep.subr.mxu0 0.0
    %1646 = vmatpush1.msra.mxu0 %v1608
    %1647 = vmatprep.subr.mxu0 0.0
    %1648 = vmatpush1.msra.mxu0 %v1609
    %1649 = vmatprep.subr.mxu0 0.0
    %1650 = vmatpush1.msra.mxu0 0.0
    %1651 = vmatprep.subr.mxu0 0.0
    %1652 = vmatpush1.msra.mxu0 0.0
    %1653 = vmatprep.subr.mxu0 0.0
    %1654 = vmatpush1.msra.mxu0 0.0
    %1655 = vmatprep.subr.mxu0 0.0
    %1656 = vmatpush1.msra.mxu0 0.0
    %1657 = vmatprep.subr.mxu0 0.0
    %1658 = vmatpush1.msra.mxu0 0.0
    %1659 = vmatprep.subr.mxu0 0.0
    %1660 = vmatpush1.msra.mxu0 0.0
    %1661 = vmatprep.subr.mxu0 0.0
    %1662 = vmatpush1.msra.mxu0 0.0
    %1663 = vmatprep.subr.mxu0 0.0
    %1664 = vmatpush1.msra.mxu0 0.0
    %1665 = vmatprep.subr.mxu0 0.0
    %1666 = vmatpush1.msra.mxu0 0.0
    %1667 = vmatprep.subr.mxu0 0.0
    %1668 = vmatpush1.msra.mxu0 0.0
    %1669 = vmatprep.subr.mxu0 0.0
    %1670 = vmatpush1.msra.mxu0 0.0
    %1671 = vmatprep.subr.mxu0 0.0
    %1672 = vmatpush1.msra.mxu0 0.0
    %1673 = vmatprep.subr.mxu0 0.0
    %1674 = vmatpush1.msra.mxu0 0.0
    %1675 = vmatprep.subr.mxu0 0.0
    %1676 = vmatpush1.msra.mxu0 0.0
    %1677 = vmatprep.subr.mxu0 0.0
    %1678 = vmatpush1.msra.mxu0 0.0
    %1679 = vmatprep.subr.mxu0 0.0
    %1680 = vmatpush1.msra.mxu0 0.0
    %1681 = vmatprep.mubr.f32.mxu0 0.0
    %1682 = vmatmul.mubr.f32.gmra.mrb[0].mxu0 %v1593
    %v1683 = vpop.f32.mrb[0].mxu0
    %v1684 = vadd.f32 %v1615, %v1683
    %v1685 = vpop.f32.mrb[0].mxu0
    %1686 = vdwg.mxu0
    %1687 = vst [vmem:[#allocation13] sm:$0x3] %v1684
    // Predicated region
    $region58: #{_lambda_.1} parent=1 // pred_check
      _
    $region59: #{_lambda_.1} parent=1 // pred_check_branch
      %1689 = sbr.rel (0) target = $region61
    $region60: #{_lambda_.1} parent=1 // pred_region
      %s1691 = ssub.s32 32, 32
      %1692 = vsyncadd [#allocation6], %s1691
      %s1694 = sshll.u32 [#allocation13], 4
      %s1695 = int_to_ptr.vmem [resolvable:$true] %s1694
      %1697 = dma.vmem_to_hbm [thread:$0]  %s1695, 32, %s9, [#allocation6]
    $region61: #{_lambda_.1} parent=1 // pred_fallthru
      _
    // Predicated region
    $region62: #{_lambda_.1} parent=1 // pred_check
      _
    $region63: #{_lambda_.1} parent=1 // pred_check_branch
      %1699 = sbr.rel (0) target = $region65
    $region64: #{_lambda_.1} parent=1 // pred_region
      %1700 = dma.done [#allocation6], 32
    $region65: #{_lambda_.1} parent=1 // pred_fallthru
      _
    %1701 = vsyncpa [#allocation5], 1
    %1702 = vsyncpa [#allocation8], 1
    %1703 = vsyncpa [#allocation11], 1
    %1704 = vsyncpa [#allocation6], 1

</llo_original>
